<compile_context>
chip_gen: v7x
topology: tpu7x:2x2x1
jax: 0.10.0
libtpu: 0.0.40
codegen_flags: <defaults>
</compile_context>

<pallas_src>
import math
import jax
import jax.numpy as jnp
from jax.experimental import pallas as pl
from jax.experimental.pallas import tpu as pltpu


def _round_up(x, m):
    return ((x + m - 1) // m) * m


def _vmem_capacity_bytes():
    """Per-core VMEM capacity; conservative default (v7x) if the query fails."""
    try:
        info = pltpu.get_tpu_info()
        for name in ("vmem_capacity_bytes", "vmem_size_bytes", "vmem_bytes"):
            v = getattr(info, name, None)
            if v:
                return int(v)
    except Exception:
        pass
    return 64 * 1024 * 1024


# -----------------------------------------------------------------------------
# Padded weight layout helpers (gate order r, z, n — matches torch.nn.GRU).
# Each gate block starts at a 128-lane boundary so gate slices are free views.
# -----------------------------------------------------------------------------
def _pad_gate_matrix(w, H, P, rows):
    """w: (in_dim, 3H) -> (rows, 3P); gate g lives in cols [g*P, g*P+H)."""
    in_dim = w.shape[0]
    out = jnp.zeros((rows, 3 * P), jnp.float32)
    for g in range(3):
        out = out.at[:in_dim, g * P:g * P + H].set(w[:, g * H:(g + 1) * H])
    return out


def _pad_gate_bias(b, H, P):
    """b: (1, 3H) -> (1, 3P)."""
    out = jnp.zeros((1, 3 * P), jnp.float32)
    for g in range(3):
        out = out.at[:, g * P:g * P + H].set(b[:, g * H:(g + 1) * H])
    return out


# -----------------------------------------------------------------------------
# Fused kernel: all layers + all timesteps + fc_out for one tile of N rows.
#   x_ref    : (T, tn, Df)   bf16  time-major input tile (native feature width)
#   wih0_ref : (Df, 3P)      bf16  layer-0 input weights
#   wihr_ref : (Lr, P, 3P)   bf16  input weights for layers 1..L-1 (dummy if L==1)
#   whh_ref  : (L, P, 3P)    bf16  hidden weights
#   bcomb_ref: (L, 1, 3P)    f32   r/z gates: b_ih+b_hh; n gate: b_ih only
#   bhn_ref  : (L, 1, P)     f32   b_hh of the n gate (kept separate per torch GRU)
#   fcw_ref  : (P, 128)      bf16  fc weight in column 0
#   fcb_ref  : (1, 128)      f32   fc bias in column 0
#   out_ref  : (tn, 128)     f32   prediction in column 0 (lane-dense store)
#   seq_ref  : (T*, tn, P)   bf16  scratch: inter-layer sequence (VMEM only)
#   gi_ref   : (T, tn, 3P)   f32   scratch: hoisted input projections
# -----------------------------------------------------------------------------
def fused_gru_fc_kernel(x_ref, wih0_ref, wihr_ref, whh_ref, bcomb_ref, bhn_ref,
                        fcw_ref, fcb_ref, out_ref, seq_ref, gi_ref):
    T = x_ref.shape[0]
    tn = x_ref.shape[1]
    L, P = whh_ref.shape[0], whh_ref.shape[1]

    h = jnp.zeros((tn, P), jnp.float32)
    for l in range(L):                                   # static (fused) layer loop
        b_in = bcomb_ref[l]                              # (1, 3P) f32 (hoisted bias load)
        b_hn = bhn_ref[l]                                # (1, P)  f32

        # ---- hoisted input projection: independent across t -> off the critical path
        def proj(t, carry, l=l, b_in=b_in):
            src = x_ref[t] if l == 0 else seq_ref[t]     # (tn, Df) / (tn, P) bf16
            w_in = wih0_ref[...] if l == 0 else wihr_ref[l - 1]
            gi_ref[t] = jnp.dot(src, w_in,
                                preferred_element_type=jnp.float32) + b_in
            return carry

        jax.lax.fori_loop(0, T, proj, 0)

        # ---- serial recurrence: only h_prev @ W_hh per step on the MXU critical path
        def step(t, h_prev, l=l, b_hn=b_hn):
            gi = gi_ref[t]                               # (tn, 3P) f32
            gh = jnp.dot(h_prev.astype(whh_ref.dtype), whh_ref[l],
                         preferred_element_type=jnp.float32)
            # torch.nn.GRU gates; slices are 128-lane aligned (P % 128 == 0)
            r = jax.nn.sigmoid(gi[:, 0:P] + gh[:, 0:P])
            z = jax.nn.sigmoid(gi[:, P:2 * P] + gh[:, P:2 * P])
            n = jnp.tanh(gi[:, 2 * P:3 * P] + r * (gh[:, 2 * P:3 * P] + b_hn))
            h_new = n + z * (h_prev - n)                 # == (1-z)*n + z*h_prev
            if l < L - 1:                                # intermediate layers feed next layer
                seq_ref[t] = h_new.astype(seq_ref.dtype)
            return h_new

        h = jax.lax.fori_loop(0, T, step, jnp.zeros((tn, P), jnp.float32))

    # fc_out fused epilogue (padded hidden columns are exactly zero -> column 0 exact).
    out_ref[...] = (jnp.dot(h.astype(fcw_ref.dtype), fcw_ref[...],
                            preferred_element_type=jnp.float32) + fcb_ref[...])


# -----------------------------------------------------------------------------
# VMEM accounting (lane/sublane padding included) + pallas_call wrapper
# -----------------------------------------------------------------------------
def _vmem_estimate_bytes(T, tn, Df, P, L):
    seq_T = T if L > 1 else 1
    Lr = max(L - 1, 1)
    lane = 128
    x_tile = 2 * T * tn * max(lane, _round_up(Df, lane)) * 2   # bf16, lane-padded, 2 buffers
    out_tile = 2 * tn * lane * 4
    gi = T * tn * 3 * P * 4                                    # f32 projection scratch
    seq = seq_T * tn * P * 2                                   # bf16 inter-layer sequence
    temps = 4 * tn * 3 * P * 4                                 # gi/gh/gate temporaries
    weights = ((_round_up(Df, 16) + (Lr + L) * P) * 3 * P * 2  # W_ih0 + W_ihr + W_hh (bf16)
               + L * 8 * (3 * P + P) * 4                       # biases (f32, sublane-padded)
               + P * lane * 2 + 8 * lane * 4)                  # fc weight/bias
    return x_tile + out_tile + gi + seq + temps + 2 * weights  # weights x2 (conservative)


def fused_forward(x_pad, wih0, wihr, whh, bcomb, bhn, fcw, fcb, *,
                  tn, vmem_limit_bytes, single_buffer_weights=True):
    T, N_pad, Df = x_pad.shape
    L, P = whh.shape[0], whh.shape[1]
    Lr = wihr.shape[0]
    num_tiles = N_pad // tn
    seq_T = T if L > 1 else 1

    def const_spec(shape):
        # Grid-invariant operand: single-buffer it when supported.
        if single_buffer_weights:
            return pl.BlockSpec(shape, lambda i: (0,) * len(shape),
                                pipeline_mode=pl.Buffered(1))
        return pl.BlockSpec(shape, lambda i: (0,) * len(shape))

    grid_spec = pltpu.PrefetchScalarGridSpec(
        num_scalar_prefetch=0,
        grid=(num_tiles,),
        in_specs=[
            pl.BlockSpec((T, tn, Df), lambda i: (0, i, 0)),    # x tile (native feature width)
            const_spec((Df, 3 * P)),                           # W_ih layer 0
            const_spec((Lr, P, 3 * P)),                        # W_ih layers 1..L-1
            const_spec((L, P, 3 * P)),                         # W_hh
            const_spec((L, 1, 3 * P)),                         # folded biases
            const_spec((L, 1, P)),                             # b_hh of n gate
            const_spec((P, 128)),                              # fc weight
            const_spec((1, 128)),                              # fc bias
        ],
        out_specs=pl.BlockSpec((tn, 128), lambda i: (i, 0)),
        scratch_shapes=[
            pltpu.VMEM((seq_T, tn, P), jnp.bfloat16),          # inter-layer sequence
            pltpu.VMEM((T, tn, 3 * P), jnp.float32),           # hoisted input projections
        ],
    )
    return pl.pallas_call(
        fused_gru_fc_kernel,
        out_shape=jax.ShapeDtypeStruct((N_pad, 128), jnp.float32),
        grid_spec=grid_spec,
        compiler_params=pltpu.CompilerParams(
            dimension_semantics=("parallel",),
            vmem_limit_bytes=int(vmem_limit_bytes)),
    )(x_pad, wih0, wihr, whh, bcomb, bhn, fcw, fcb)


# -----------------------------------------------------------------------------
# Model wrapper
# -----------------------------------------------------------------------------
class HeterographModelPallas:
    def __init__(self, base_model, d_feat, hidden_size, num_layers, dropout, key):
        assert base_model == "GRU"  # TODO(synk): LSTM branch of the base class not implemented.
        self.d_feat = d_feat
        self.hidden_size = hidden_size
        self.num_layers = num_layers
        self.use_residual = False
        # dropout between GRU layers is inactive at inference -> no-op here.

        H, L = hidden_size, num_layers
        stdv = 1.0 / math.sqrt(H)
        raw = {}
        k = key
        for l in range(L):
            in_dim = d_feat if l == 0 else H
            k, k1, k2, k3, k4 = jax.random.split(k, 5)
            raw[f"w_ih_{l}"] = jax.random.uniform(k1, (in_dim, 3 * H), jnp.float32, -stdv, stdv)
            raw[f"w_hh_{l}"] = jax.random.uniform(k2, (H, 3 * H), jnp.float32, -stdv, stdv)
            raw[f"b_ih_{l}"] = jax.random.uniform(k3, (1, 3 * H), jnp.float32, -stdv, stdv)
            raw[f"b_hh_{l}"] = jax.random.uniform(k4, (1, 3 * H), jnp.float32, -stdv, stdv)
        k, k1, k2 = jax.random.split(k, 3)
        raw["fc_w"] = jax.random.uniform(k1, (H, 1), jnp.float32, -stdv, stdv)
        raw["fc_b"] = jax.random.uniform(k2, (1, 1), jnp.float32, -stdv, stdv)
        self.raw = raw  # unpadded f32 params (used by the pure-JAX reference)

        P = _round_up(H, 128)
        self.P = P
        bf16 = jnp.bfloat16
        # Layer-0 input weight keeps native d_feat rows (no feature-dim padding).
        self.wih0 = _pad_gate_matrix(raw["w_ih_0"], H, P, d_feat).astype(bf16)
        if L > 1:
            self.wihr = jnp.stack(
                [_pad_gate_matrix(raw[f"w_ih_{l}"], H, P, P) for l in range(1, L)]).astype(bf16)
        else:
            self.wihr = jnp.zeros((1, P, 3 * P), bf16)         # unused dummy
        self.whh = jnp.stack(
            [_pad_gate_matrix(raw[f"w_hh_{l}"], H, P, P) for l in range(L)]).astype(bf16)
        # Fold b_ih + b_hh for the r/z gates; the n gate keeps b_hh separate (torch GRU).
        bcomb, bhn = [], []
        for l in range(L):
            bi, bh = raw[f"b_ih_{l}"], raw[f"b_hh_{l}"]
            comb = jnp.concatenate(
                [bi[:, 0:H] + bh[:, 0:H],
                 bi[:, H:2 * H] + bh[:, H:2 * H],
                 bi[:, 2 * H:3 * H]], axis=1)
            bcomb.append(_pad_gate_bias(comb, H, P))
            bhn.append(jnp.zeros((1, P), jnp.float32).at[:, :H].set(bh[:, 2 * H:3 * H]))
        self.bcomb = jnp.stack(bcomb)                          # (L, 1, 3P) f32
        self.bhn = jnp.stack(bhn)                              # (L, 1, P)  f32
        self.fcw = jnp.zeros((P, 128), jnp.float32).at[:H, 0].set(raw["fc_w"][:, 0]).astype(bf16)
        self.fcb = jnp.zeros((1, 128), jnp.float32).at[0, 0].set(raw["fc_b"][0, 0])

        self._single_buffer_weights = True                     # fallback flag

    # --------------------------------------------------------------------- #
    def _choose_tile_n(self, N, T):
        cap = _vmem_capacity_bytes()
        budget = (cap * 7) // 10            # ~45 MiB on v7x, ~90 MiB on v5e/v6e
        tn_max = 512 if cap >= (96 << 20) else 256
        tn = max(16, min(tn_max, _round_up(N, 16)))
        tn = (tn // 16) * 16
        while tn > 16 and _vmem_estimate_bytes(T, tn, self.d_feat, self.P,
                                               self.num_layers) > budget:
            tn = max(16, ((tn // 2) // 16) * 16)
        return tn, cap

    def forward_graph(self, h0, index=None):
        # TODO(synk): abstract in the base class (DGL heterograph attention); identity here.
        return h0

    def __call__(self, x, index=None):
        N = x.shape[0]
        T = x.shape[1] // self.d_feat
        # (N, d_feat*T) -> (N, d_feat, T) -> time-major (T, N, d_feat); native feature width.
        x3 = jnp.transpose(x.reshape(N, self.d_feat, T), (2, 0, 1)).astype(jnp.bfloat16)

        tn, cap = self._choose_tile_n(N, T)
        num_tiles = -(-N // tn)
        if num_tiles > 1 and num_tiles % 2 == 1:
            num_tiles += 1                  # even tile count -> both v7x TensorCores busy
        N_pad = num_tiles * tn
        x_pad = jnp.zeros((T, N_pad, self.d_feat), jnp.bfloat16).at[:, :N, :].set(x3)

        est = _vmem_estimate_bytes(T, tn, self.d_feat, self.P, self.num_layers)
        vmem_limit = min(max(est + (8 << 20), 32 << 20), int(cap * 0.9))

        def run(single_buffer):
            return fused_forward(x_pad, self.wih0, self.wihr, self.whh,
                                 self.bcomb, self.bhn, self.fcw, self.fcb,
                                 tn=tn, vmem_limit_bytes=vmem_limit,
                                 single_buffer_weights=single_buffer)

        if self._single_buffer_weights:
            try:
                out = run(True)
            except Exception:
                self._single_buffer_weights = False
                out = run(False)
        else:
            out = run(False)
        return out[:N, 0]                   # == fc_out(h_last).squeeze().reshape(-1)


# -----------------------------------------------------------------------------
# Pure-JAX reference (torch.nn.GRU semantics, f32 HIGHEST precision).
# -----------------------------------------------------------------------------
def _reference_forward(x, raw, d_feat, H, L):
    N = x.shape[0]
    T = x.shape[1] // d_feat
    hi = jax.lax.Precision.HIGHEST
    seq = jnp.transpose(x.reshape(N, d_feat, T), (2, 0, 1)).astype(jnp.float32)
    for l in range(L):
        wih, whh = raw[f"w_ih_{l}"], raw[f"w_hh_{l}"]
        bih, bhh = raw[f"b_ih_{l}"], raw[f"b_hh_{l}"]

        def step(h, x_t, wih=wih, whh=whh, bih=bih, bhh=bhh):
            gi = jnp.dot(x_t, wih, precision=hi) + bih
            gh = jnp.dot(h, whh, precision=hi) + bhh
            r = jax.nn.sigmoid(gi[:, :H] + gh[:, :H])
            z = jax.nn.sigmoid(gi[:, H:2 * H] + gh[:, H:2 * H])
            n = jnp.tanh(gi[:, 2 * H:] + r * gh[:, 2 * H:])
            h_new = (1.0 - z) * n + z * h
            return h_new, h_new

        _, outs = jax.lax.scan(step, jnp.zeros((N, H), jnp.float32), seq)
        seq = outs
    h = seq[-1]
    return (jnp.dot(h, raw["fc_w"], precision=hi) + raw["fc_b"]).reshape(-1)


if __name__ == "__main__":
    N, d_feat, T, hidden, layers = 8, 4, 8, 32, 2
    key = jax.random.PRNGKey(0)
    kx, kp = jax.random.split(key)
    x = jax.random.normal(kx, (N, d_feat * T), jnp.float32)

    model = HeterographModelPallas("GRU", d_feat, hidden, layers, dropout=0.0, key=kp)
    y = jax.block_until_ready(model(x))
    assert y.shape == (N,), y.shape

    y_ref = jax.block_until_ready(_reference_forward(x, model.raw, d_feat, hidden, layers))
    max_err = float(jnp.max(jnp.abs(y - y_ref)))
    # bf16 weight/activation storage vs an f32 HIGHEST-precision reference.
    assert max_err < 3e-2, f"mismatch vs reference: max|diff|={max_err}"
    print("KERNEL_OK")
</pallas_src>

<mosaic_0001>
module attributes {stable_mosaic.version = 11 : i64} {
  func.func @fused_gru_fc_kernel(%arg0: i32, %arg1: memref<8x16x4xbf16, #tpu.memory_space<vmem>>, %arg2: memref<4x384xbf16, #tpu.memory_space<vmem>>, %arg3: memref<1x128x384xbf16, #tpu.memory_space<vmem>>, %arg4: memref<2x128x384xbf16, #tpu.memory_space<vmem>>, %arg5: memref<2x1x384xf32, #tpu.memory_space<vmem>>, %arg6: memref<2x1x128xf32, #tpu.memory_space<vmem>>, %arg7: memref<128x128xbf16, #tpu.memory_space<vmem>>, %arg8: memref<1x128xf32, #tpu.memory_space<vmem>>, %arg9: memref<16x128xf32, #tpu.memory_space<vmem>>, %arg10: memref<8x16x128xbf16, #tpu.memory_space<vmem>>, %arg11: memref<8x16x384xf32, #tpu.memory_space<vmem>>) attributes {dimension_semantics = [#tpu.dimension_semantics<parallel>], iteration_bounds = array<i64: 1>, scalar_prefetch = 0 : i64, scratch_operands = 2 : i64, tpu.core_type = #tpu.core_type<tc>, window_params = [{transform_indices = @transform_0, window_bounds = array<i64: 8, 16, 4>}, {pipeline_mode = #tpu.pipeline_mode<synchronous>, transform_indices = @transform_1, window_bounds = array<i64: 4, 384>}, {pipeline_mode = #tpu.pipeline_mode<synchronous>, transform_indices = @transform_2, window_bounds = array<i64: 1, 128, 384>}, {pipeline_mode = #tpu.pipeline_mode<synchronous>, transform_indices = @transform_3, window_bounds = array<i64: 2, 128, 384>}, {pipeline_mode = #tpu.pipeline_mode<synchronous>, transform_indices = @transform_4, window_bounds = array<i64: 2, 1, 384>}, {pipeline_mode = #tpu.pipeline_mode<synchronous>, transform_indices = @transform_5, window_bounds = array<i64: 2, 1, 128>}, {pipeline_mode = #tpu.pipeline_mode<synchronous>, transform_indices = @transform_6, window_bounds = array<i64: 128, 128>}, {pipeline_mode = #tpu.pipeline_mode<synchronous>, transform_indices = @transform_7, window_bounds = array<i64: 1, 128>}, {transform_indices = @transform_8, window_bounds = array<i64: 16, 128>}]} {
    %c0 = arith.constant 0 : index
    %c0_0 = arith.constant 0 : index
    %c0_1 = arith.constant 0 : index
    %0 = vector.load %arg5[%c0, %c0_0, %c0_1] : memref<2x1x384xf32, #tpu.memory_space<vmem>>, vector<1x1x384xf32>
    %1 = vector.shape_cast %0 : vector<1x1x384xf32> to vector<1x384xf32>
    %c0_2 = arith.constant 0 : index
    %c0_3 = arith.constant 0 : index
    %c0_4 = arith.constant 0 : index
    %2 = vector.load %arg6[%c0_2, %c0_3, %c0_4] : memref<2x1x128xf32, #tpu.memory_space<vmem>>, vector<1x1x128xf32>
    %3 = vector.shape_cast %2 : vector<1x1x128xf32> to vector<1x128xf32>
    %c0_i32 = arith.constant 0 : i32
    %c8_i32 = arith.constant 8 : i32
    %4 = arith.addi %c0_i32, %c8_i32 : i32
    %c1_i32 = arith.constant 1 : i32
    scf.for %arg12 = %c0_i32 to %4 step %c1_i32  : i32 {
      %23 = arith.index_cast %arg12 : i32 to index
      %c0_31 = arith.constant 0 : index
      %c0_32 = arith.constant 0 : index
      %24 = vector.load %arg1[%23, %c0_31, %c0_32] : memref<8x16x4xbf16, #tpu.memory_space<vmem>>, vector<1x16x4xbf16>
      %25 = vector.shape_cast %24 : vector<1x16x4xbf16> to vector<16x4xbf16>
      %c0_33 = arith.constant 0 : index
      %c0_34 = arith.constant 0 : index
      %26 = vector.load %arg2[%c0_33, %c0_34] : memref<4x384xbf16, #tpu.memory_space<vmem>>, vector<4x384xbf16>
      %cst_35 = arith.constant dense<0.000000e+00> : vector<16x384xf32>
      %27 = tpu.matmul %25, %26, %cst_35 {dimension_numbers = #tpu.dot_dimension_numbers<[1], [0], [0], [1], [0, 0, 1, 1], [], []>} : vector<16x4xbf16>, vector<4x384xbf16>, vector<16x384xf32> -> vector<16x384xf32>
      %28 = vector.broadcast %1 : vector<1x384xf32> to vector<16x384xf32>
      %29 = arith.addf %27, %28 : vector<16x384xf32>
      %30 = arith.index_cast %arg12 : i32 to index
      %c0_36 = arith.constant 0 : index
      %c0_37 = arith.constant 0 : index
      %31 = vector.load %arg11[%30, %c0_36, %c0_37] : memref<8x16x384xf32, #tpu.memory_space<vmem>>, vector<1x16x384xf32>
      %32 = vector.shape_cast %31 : vector<1x16x384xf32> to vector<16x384xf32>
      %33 = vector.shape_cast %29 : vector<16x384xf32> to vector<1x16x384xf32>
      tpu.vector_store %arg11[%30, %c0_36, %c0_37], %33 {strides = array<i32>} : memref<8x16x384xf32, #tpu.memory_space<vmem>>, vector<1x16x384xf32>,
    }
    %c8_i32_5 = arith.constant 8 : i32
    %cst = arith.constant 0.000000e+00 : f32
    %5 = vector.broadcast %cst : f32 to vector<16x128xf32>
    %c0_i32_6 = arith.constant 0 : i32
    %c8_i32_7 = arith.constant 8 : i32
    %6 = arith.addi %c0_i32_6, %c8_i32_7 : i32
    %c1_i32_8 = arith.constant 1 : i32
    %7 = scf.for %arg12 = %c0_i32_6 to %6 step %c1_i32_8 iter_args(%arg13 = %5) -> (vector<16x128xf32>)  : i32 {
      %23 = arith.index_cast %arg12 : i32 to index
      %c0_31 = arith.constant 0 : index
      %c0_32 = arith.constant 0 : index
      %24 = vector.load %arg11[%23, %c0_31, %c0_32] : memref<8x16x384xf32, #tpu.memory_space<vmem>>, vector<1x16x384xf32>
      %25 = vector.shape_cast %24 : vector<1x16x384xf32> to vector<16x384xf32>
      %26 = arith.truncf %arg13 : vector<16x128xf32> to vector<16x128xbf16>
      %c0_33 = arith.constant 0 : index
      %c0_34 = arith.constant 0 : index
      %c0_35 = arith.constant 0 : index
      %27 = vector.load %arg4[%c0_33, %c0_34, %c0_35] : memref<2x128x384xbf16, #tpu.memory_space<vmem>>, vector<1x128x384xbf16>
      %28 = vector.shape_cast %27 : vector<1x128x384xbf16> to vector<128x384xbf16>
      %cst_36 = arith.constant dense<0.000000e+00> : vector<16x384xf32>
      %29 = tpu.matmul %26, %28, %cst_36 {dimension_numbers = #tpu.dot_dimension_numbers<[1], [0], [0], [1], [0, 0, 1, 1], [], []>} : vector<16x128xbf16>, vector<128x384xbf16>, vector<16x384xf32> -> vector<16x384xf32>
      %30 = vector.extract_strided_slice %25 {offsets = [0, 0], sizes = [16, 128], strides = [1, 1]} : vector<16x384xf32> to vector<16x128xf32>
      %31 = vector.extract_strided_slice %29 {offsets = [0, 0], sizes = [16, 128], strides = [1, 1]} : vector<16x384xf32> to vector<16x128xf32>
      %32 = arith.addf %30, %31 : vector<16x128xf32>
      %33 = arith.negf %32 : vector<16x128xf32>
      %34 = math.exp %33 : vector<16x128xf32>
      %cst_37 = arith.constant 1.000000e+00 : f32
      %35 = vector.broadcast %cst_37 : f32 to vector<16x128xf32>
      %36 = arith.addf %35, %34 : vector<16x128xf32>
      %37 = arith.divf %35, %36 : vector<16x128xf32>
      %38 = vector.extract_strided_slice %25 {offsets = [0, 128], sizes = [16, 128], strides = [1, 1]} : vector<16x384xf32> to vector<16x128xf32>
      %39 = vector.extract_strided_slice %29 {offsets = [0, 128], sizes = [16, 128], strides = [1, 1]} : vector<16x384xf32> to vector<16x128xf32>
      %40 = arith.addf %38, %39 : vector<16x128xf32>
      %41 = arith.negf %40 : vector<16x128xf32>
      %42 = math.exp %41 : vector<16x128xf32>
      %cst_38 = arith.constant 1.000000e+00 : f32
      %43 = vector.broadcast %cst_38 : f32 to vector<16x128xf32>
      %44 = arith.addf %43, %42 : vector<16x128xf32>
      %45 = arith.divf %43, %44 : vector<16x128xf32>
      %46 = vector.extract_strided_slice %25 {offsets = [0, 256], sizes = [16, 128], strides = [1, 1]} : vector<16x384xf32> to vector<16x128xf32>
      %47 = vector.extract_strided_slice %29 {offsets = [0, 256], sizes = [16, 128], strides = [1, 1]} : vector<16x384xf32> to vector<16x128xf32>
      %48 = vector.broadcast %3 : vector<1x128xf32> to vector<16x128xf32>
      %49 = arith.addf %47, %48 : vector<16x128xf32>
      %50 = arith.mulf %37, %49 : vector<16x128xf32>
      %51 = arith.addf %46, %50 : vector<16x128xf32>
      %52 = math.tanh %51 : vector<16x128xf32>
      %53 = arith.subf %arg13, %52 : vector<16x128xf32>
      %54 = arith.mulf %45, %53 : vector<16x128xf32>
      %55 = arith.addf %52, %54 : vector<16x128xf32>
      %56 = arith.truncf %55 : vector<16x128xf32> to vector<16x128xbf16>
      %57 = arith.index_cast %arg12 : i32 to index
      %c0_39 = arith.constant 0 : index
      %c0_40 = arith.constant 0 : index
      %58 = vector.load %arg10[%57, %c0_39, %c0_40] : memref<8x16x128xbf16, #tpu.memory_space<vmem>>, vector<1x16x128xbf16>
      %59 = vector.shape_cast %58 : vector<1x16x128xbf16> to vector<16x128xbf16>
      %60 = vector.shape_cast %56 : vector<16x128xbf16> to vector<1x16x128xbf16>
      tpu.vector_store %arg10[%57, %c0_39, %c0_40], %60 {strides = array<i32>} : memref<8x16x128xbf16, #tpu.memory_space<vmem>>, vector<1x16x128xbf16>,
      scf.yield %55 : vector<16x128xf32>
    }
    %c8_i32_9 = arith.constant 8 : i32
    %c1 = arith.constant 1 : index
    %c0_10 = arith.constant 0 : index
    %c0_11 = arith.constant 0 : index
    %8 = vector.load %arg5[%c1, %c0_10, %c0_11] : memref<2x1x384xf32, #tpu.memory_space<vmem>>, vector<1x1x384xf32>
    %9 = vector.shape_cast %8 : vector<1x1x384xf32> to vector<1x384xf32>
    %c1_12 = arith.constant 1 : index
    %c0_13 = arith.constant 0 : index
    %c0_14 = arith.constant 0 : index
    %10 = vector.load %arg6[%c1_12, %c0_13, %c0_14] : memref<2x1x128xf32, #tpu.memory_space<vmem>>, vector<1x1x128xf32>
    %11 = vector.shape_cast %10 : vector<1x1x128xf32> to vector<1x128xf32>
    %c0_i32_15 = arith.constant 0 : i32
    %c8_i32_16 = arith.constant 8 : i32
    %12 = arith.addi %c0_i32_15, %c8_i32_16 : i32
    %c1_i32_17 = arith.constant 1 : i32
    scf.for %arg12 = %c0_i32_15 to %12 step %c1_i32_17  : i32 {
      %23 = arith.index_cast %arg12 : i32 to index
      %c0_31 = arith.constant 0 : index
      %c0_32 = arith.constant 0 : index
      %24 = vector.load %arg10[%23, %c0_31, %c0_32] : memref<8x16x128xbf16, #tpu.memory_space<vmem>>, vector<1x16x128xbf16>
      %25 = vector.shape_cast %24 : vector<1x16x128xbf16> to vector<16x128xbf16>
      %c0_33 = arith.constant 0 : index
      %c0_34 = arith.constant 0 : index
      %c0_35 = arith.constant 0 : index
      %26 = vector.load %arg3[%c0_33, %c0_34, %c0_35] : memref<1x128x384xbf16, #tpu.memory_space<vmem>>, vector<1x128x384xbf16>
      %27 = vector.shape_cast %26 : vector<1x128x384xbf16> to vector<128x384xbf16>
      %cst_36 = arith.constant dense<0.000000e+00> : vector<16x384xf32>
      %28 = tpu.matmul %25, %27, %cst_36 {dimension_numbers = #tpu.dot_dimension_numbers<[1], [0], [0], [1], [0, 0, 1, 1], [], []>} : vector<16x128xbf16>, vector<128x384xbf16>, vector<16x384xf32> -> vector<16x384xf32>
      %29 = vector.broadcast %9 : vector<1x384xf32> to vector<16x384xf32>
      %30 = arith.addf %28, %29 : vector<16x384xf32>
      %31 = arith.index_cast %arg12 : i32 to index
      %c0_37 = arith.constant 0 : index
      %c0_38 = arith.constant 0 : index
      %32 = vector.load %arg11[%31, %c0_37, %c0_38] : memref<8x16x384xf32, #tpu.memory_space<vmem>>, vector<1x16x384xf32>
      %33 = vector.shape_cast %32 : vector<1x16x384xf32> to vector<16x384xf32>
      %34 = vector.shape_cast %30 : vector<16x384xf32> to vector<1x16x384xf32>
      tpu.vector_store %arg11[%31, %c0_37, %c0_38], %34 {strides = array<i32>} : memref<8x16x384xf32, #tpu.memory_space<vmem>>, vector<1x16x384xf32>,
    }
    %c8_i32_18 = arith.constant 8 : i32
    %cst_19 = arith.constant 0.000000e+00 : f32
    %13 = vector.broadcast %cst_19 : f32 to vector<16x128xf32>
    %c0_i32_20 = arith.constant 0 : i32
    %c8_i32_21 = arith.constant 8 : i32
    %14 = arith.addi %c0_i32_20, %c8_i32_21 : i32
    %c1_i32_22 = arith.constant 1 : i32
    %15 = scf.for %arg12 = %c0_i32_20 to %14 step %c1_i32_22 iter_args(%arg13 = %13) -> (vector<16x128xf32>)  : i32 {
      %23 = arith.index_cast %arg12 : i32 to index
      %c0_31 = arith.constant 0 : index
      %c0_32 = arith.constant 0 : index
      %24 = vector.load %arg11[%23, %c0_31, %c0_32] : memref<8x16x384xf32, #tpu.memory_space<vmem>>, vector<1x16x384xf32>
      %25 = vector.shape_cast %24 : vector<1x16x384xf32> to vector<16x384xf32>
      %26 = arith.truncf %arg13 : vector<16x128xf32> to vector<16x128xbf16>
      %c1_33 = arith.constant 1 : index
      %c0_34 = arith.constant 0 : index
      %c0_35 = arith.constant 0 : index
      %27 = vector.load %arg4[%c1_33, %c0_34, %c0_35] : memref<2x128x384xbf16, #tpu.memory_space<vmem>>, vector<1x128x384xbf16>
      %28 = vector.shape_cast %27 : vector<1x128x384xbf16> to vector<128x384xbf16>
      %cst_36 = arith.constant dense<0.000000e+00> : vector<16x384xf32>
      %29 = tpu.matmul %26, %28, %cst_36 {dimension_numbers = #tpu.dot_dimension_numbers<[1], [0], [0], [1], [0, 0, 1, 1], [], []>} : vector<16x128xbf16>, vector<128x384xbf16>, vector<16x384xf32> -> vector<16x384xf32>
      %30 = vector.extract_strided_slice %25 {offsets = [0, 0], sizes = [16, 128], strides = [1, 1]} : vector<16x384xf32> to vector<16x128xf32>
      %31 = vector.extract_strided_slice %29 {offsets = [0, 0], sizes = [16, 128], strides = [1, 1]} : vector<16x384xf32> to vector<16x128xf32>
      %32 = arith.addf %30, %31 : vector<16x128xf32>
      %33 = arith.negf %32 : vector<16x128xf32>
      %34 = math.exp %33 : vector<16x128xf32>
      %cst_37 = arith.constant 1.000000e+00 : f32
      %35 = vector.broadcast %cst_37 : f32 to vector<16x128xf32>
      %36 = arith.addf %35, %34 : vector<16x128xf32>
      %37 = arith.divf %35, %36 : vector<16x128xf32>
      %38 = vector.extract_strided_slice %25 {offsets = [0, 128], sizes = [16, 128], strides = [1, 1]} : vector<16x384xf32> to vector<16x128xf32>
      %39 = vector.extract_strided_slice %29 {offsets = [0, 128], sizes = [16, 128], strides = [1, 1]} : vector<16x384xf32> to vector<16x128xf32>
      %40 = arith.addf %38, %39 : vector<16x128xf32>
      %41 = arith.negf %40 : vector<16x128xf32>
      %42 = math.exp %41 : vector<16x128xf32>
      %cst_38 = arith.constant 1.000000e+00 : f32
      %43 = vector.broadcast %cst_38 : f32 to vector<16x128xf32>
      %44 = arith.addf %43, %42 : vector<16x128xf32>
      %45 = arith.divf %43, %44 : vector<16x128xf32>
      %46 = vector.extract_strided_slice %25 {offsets = [0, 256], sizes = [16, 128], strides = [1, 1]} : vector<16x384xf32> to vector<16x128xf32>
      %47 = vector.extract_strided_slice %29 {offsets = [0, 256], sizes = [16, 128], strides = [1, 1]} : vector<16x384xf32> to vector<16x128xf32>
      %48 = vector.broadcast %11 : vector<1x128xf32> to vector<16x128xf32>
      %49 = arith.addf %47, %48 : vector<16x128xf32>
      %50 = arith.mulf %37, %49 : vector<16x128xf32>
      %51 = arith.addf %46, %50 : vector<16x128xf32>
      %52 = math.tanh %51 : vector<16x128xf32>
      %53 = arith.subf %arg13, %52 : vector<16x128xf32>
      %54 = arith.mulf %45, %53 : vector<16x128xf32>
      %55 = arith.addf %52, %54 : vector<16x128xf32>
      scf.yield %55 : vector<16x128xf32>
    }
    %c8_i32_23 = arith.constant 8 : i32
    %16 = arith.truncf %15 : vector<16x128xf32> to vector<16x128xbf16>
    %c0_24 = arith.constant 0 : index
    %c0_25 = arith.constant 0 : index
    %17 = vector.load %arg7[%c0_24, %c0_25] : memref<128x128xbf16, #tpu.memory_space<vmem>>, vector<128x128xbf16>
    %cst_26 = arith.constant dense<0.000000e+00> : vector<16x128xf32>
    %18 = tpu.matmul %16, %17, %cst_26 {dimension_numbers = #tpu.dot_dimension_numbers<[1], [0], [0], [1], [0, 0, 1, 1], [], []>} : vector<16x128xbf16>, vector<128x128xbf16>, vector<16x128xf32> -> vector<16x128xf32>
    %c0_27 = arith.constant 0 : index
    %c0_28 = arith.constant 0 : index
    %19 = vector.load %arg8[%c0_27, %c0_28] : memref<1x128xf32, #tpu.memory_space<vmem>>, vector<1x128xf32>
    %20 = vector.broadcast %19 : vector<1x128xf32> to vector<16x128xf32>
    %21 = arith.addf %18, %20 : vector<16x128xf32>
    %c0_29 = arith.constant 0 : index
    %c0_30 = arith.constant 0 : index
    %22 = vector.load %arg9[%c0_29, %c0_30] : memref<16x128xf32, #tpu.memory_space<vmem>>, vector<16x128xf32>
    tpu.vector_store %arg9[%c0_29, %c0_30], %21 {strides = array<i32>} : memref<16x128xf32, #tpu.memory_space<vmem>>, vector<16x128xf32>,
    return
  }
  func.func @transform_0(%arg0: i32) -> (i32, i32, i32) {
    %c0_i32 = arith.constant 0 : i32
    %c0_i32_0 = arith.constant 0 : i32
    %c0_i32_1 = arith.constant 0 : i32
    return %c0_i32, %arg0, %c0_i32_0 : i32, i32, i32
  }
  func.func @transform_1(%arg0: i32) -> (i32, i32) {
    %c0_i32 = arith.constant 0 : i32
    %c0_i32_0 = arith.constant 0 : i32
    %c0_i32_1 = arith.constant 0 : i32
    return %c0_i32, %c0_i32_0 : i32, i32
  }
  func.func @transform_2(%arg0: i32) -> (i32, i32, i32) {
    %c0_i32 = arith.constant 0 : i32
    %c0_i32_0 = arith.constant 0 : i32
    %c0_i32_1 = arith.constant 0 : i32
    %c0_i32_2 = arith.constant 0 : i32
    return %c0_i32, %c0_i32_0, %c0_i32_1 : i32, i32, i32
  }
  func.func @transform_3(%arg0: i32) -> (i32, i32, i32) {
    %c0_i32 = arith.constant 0 : i32
    %c0_i32_0 = arith.constant 0 : i32
    %c0_i32_1 = arith.constant 0 : i32
    %c0_i32_2 = arith.constant 0 : i32
    return %c0_i32, %c0_i32_0, %c0_i32_1 : i32, i32, i32
  }
  func.func @transform_4(%arg0: i32) -> (i32, i32, i32) {
    %c0_i32 = arith.constant 0 : i32
    %c0_i32_0 = arith.constant 0 : i32
    %c0_i32_1 = arith.constant 0 : i32
    %c0_i32_2 = arith.constant 0 : i32
    return %c0_i32, %c0_i32_0, %c0_i32_1 : i32, i32, i32
  }
  func.func @transform_5(%arg0: i32) -> (i32, i32, i32) {
    %c0_i32 = arith.constant 0 : i32
    %c0_i32_0 = arith.constant 0 : i32
    %c0_i32_1 = arith.constant 0 : i32
    %c0_i32_2 = arith.constant 0 : i32
    return %c0_i32, %c0_i32_0, %c0_i32_1 : i32, i32, i32
  }
  func.func @transform_6(%arg0: i32) -> (i32, i32) {
    %c0_i32 = arith.constant 0 : i32
    %c0_i32_0 = arith.constant 0 : i32
    %c0_i32_1 = arith.constant 0 : i32
    return %c0_i32, %c0_i32_0 : i32, i32
  }
  func.func @transform_7(%arg0: i32) -> (i32, i32) {
    %c0_i32 = arith.constant 0 : i32
    %c0_i32_0 = arith.constant 0 : i32
    %c0_i32_1 = arith.constant 0 : i32
    return %c0_i32, %c0_i32_0 : i32, i32
  }
  func.func @transform_8(%arg0: i32) -> (i32, i32) {
    %c0_i32 = arith.constant 0 : i32
    %c0_i32_0 = arith.constant 0 : i32
    return %arg0, %c0_i32 : i32, i32
  }
}

module attributes {stable_mosaic.version = 11 : i64} {
  func.func @fused_gru_fc_kernel(%arg0: i32, %arg1: memref<8x16x4xbf16, #tpu.memory_space<vmem>>, %arg2: memref<4x384xbf16, #tpu.memory_space<vmem>>, %arg3: memref<1x128x384xbf16, #tpu.memory_space<vmem>>, %arg4: memref<2x128x384xbf16, #tpu.memory_space<vmem>>, %arg5: memref<2x1x384xf32, #tpu.memory_space<vmem>>, %arg6: memref<2x1x128xf32, #tpu.memory_space<vmem>>, %arg7: memref<128x128xbf16, #tpu.memory_space<vmem>>, %arg8: memref<1x128xf32, #tpu.memory_space<vmem>>, %arg9: memref<16x128xf32, #tpu.memory_space<vmem>>, %arg10: memref<8x16x128xbf16, #tpu.memory_space<vmem>>, %arg11: memref<8x16x384xf32, #tpu.memory_space<vmem>>) attributes {dimension_semantics = [#tpu.dimension_semantics<parallel>], iteration_bounds = array<i64: 1>, scalar_prefetch = 0 : i64, scratch_operands = 2 : i64, tpu.core_type = #tpu.core_type<tc>, window_params = [{transform_indices = @transform_0, window_bounds = array<i64: 8, 16, 4>}, {pipeline_mode = #tpu.pipeline_mode<synchronous>, transform_indices = @transform_1, window_bounds = array<i64: 4, 384>}, {pipeline_mode = #tpu.pipeline_mode<synchronous>, transform_indices = @transform_2, window_bounds = array<i64: 1, 128, 384>}, {pipeline_mode = #tpu.pipeline_mode<synchronous>, transform_indices = @transform_3, window_bounds = array<i64: 2, 128, 384>}, {pipeline_mode = #tpu.pipeline_mode<synchronous>, transform_indices = @transform_4, window_bounds = array<i64: 2, 1, 384>}, {pipeline_mode = #tpu.pipeline_mode<synchronous>, transform_indices = @transform_5, window_bounds = array<i64: 2, 1, 128>}, {pipeline_mode = #tpu.pipeline_mode<synchronous>, transform_indices = @transform_6, window_bounds = array<i64: 128, 128>}, {pipeline_mode = #tpu.pipeline_mode<synchronous>, transform_indices = @transform_7, window_bounds = array<i64: 1, 128>}, {transform_indices = @transform_8, window_bounds = array<i64: 16, 128>}]} {
    %c0 = arith.constant 0 : index
    %c0_0 = arith.constant 0 : index
    %c0_1 = arith.constant 0 : index
    %0 = vector.load %arg5[%c0, %c0_0, %c0_1] : memref<2x1x384xf32, #tpu.memory_space<vmem>>, vector<1x1x384xf32>
    %1 = vector.shape_cast %0 : vector<1x1x384xf32> to vector<1x384xf32>
    %c0_2 = arith.constant 0 : index
    %c0_3 = arith.constant 0 : index
    %c0_4 = arith.constant 0 : index
    %2 = vector.load %arg6[%c0_2, %c0_3, %c0_4] : memref<2x1x128xf32, #tpu.memory_space<vmem>>, vector<1x1x128xf32>
    %3 = vector.shape_cast %2 : vector<1x1x128xf32> to vector<1x128xf32>
    %c0_i32 = arith.constant 0 : i32
    %c8_i32 = arith.constant 8 : i32
    %4 = arith.addi %c0_i32, %c8_i32 : i32
    %c1_i32 = arith.constant 1 : i32
    scf.for %arg12 = %c0_i32 to %4 step %c1_i32  : i32 {
      %23 = arith.index_cast %arg12 : i32 to index
      %c0_31 = arith.constant 0 : index
      %c0_32 = arith.constant 0 : index
      %24 = vector.load %arg1[%23, %c0_31, %c0_32] : memref<8x16x4xbf16, #tpu.memory_space<vmem>>, vector<1x16x4xbf16>
      %25 = vector.shape_cast %24 : vector<1x16x4xbf16> to vector<16x4xbf16>
      %c0_33 = arith.constant 0 : index
      %c0_34 = arith.constant 0 : index
      %26 = vector.load %arg2[%c0_33, %c0_34] : memref<4x384xbf16, #tpu.memory_space<vmem>>, vector<4x384xbf16>
      %cst_35 = arith.constant dense<0.000000e+00> : vector<16x384xf32>
      %27 = tpu.matmul %25, %26, %cst_35 {dimension_numbers = #tpu.dot_dimension_numbers<[1], [0], [0], [1], [0, 0, 1, 1], [], []>} : vector<16x4xbf16>, vector<4x384xbf16>, vector<16x384xf32> -> vector<16x384xf32>
      %28 = vector.broadcast %1 : vector<1x384xf32> to vector<16x384xf32>
      %29 = arith.addf %27, %28 : vector<16x384xf32>
      %30 = arith.index_cast %arg12 : i32 to index
      %c0_36 = arith.constant 0 : index
      %c0_37 = arith.constant 0 : index
      %31 = vector.load %arg11[%30, %c0_36, %c0_37] : memref<8x16x384xf32, #tpu.memory_space<vmem>>, vector<1x16x384xf32>
      %32 = vector.shape_cast %31 : vector<1x16x384xf32> to vector<16x384xf32>
      %33 = vector.shape_cast %29 : vector<16x384xf32> to vector<1x16x384xf32>
      tpu.vector_store %arg11[%30, %c0_36, %c0_37], %33 {strides = array<i32>} : memref<8x16x384xf32, #tpu.memory_space<vmem>>, vector<1x16x384xf32>,
    }
    %c8_i32_5 = arith.constant 8 : i32
    %cst = arith.constant 0.000000e+00 : f32
    %5 = vector.broadcast %cst : f32 to vector<16x128xf32>
    %c0_i32_6 = arith.constant 0 : i32
    %c8_i32_7 = arith.constant 8 : i32
    %6 = arith.addi %c0_i32_6, %c8_i32_7 : i32
    %c1_i32_8 = arith.constant 1 : i32
    %7 = scf.for %arg12 = %c0_i32_6 to %6 step %c1_i32_8 iter_args(%arg13 = %5) -> (vector<16x128xf32>)  : i32 {
      %23 = arith.index_cast %arg12 : i32 to index
      %c0_31 = arith.constant 0 : index
      %c0_32 = arith.constant 0 : index
      %24 = vector.load %arg11[%23, %c0_31, %c0_32] : memref<8x16x384xf32, #tpu.memory_space<vmem>>, vector<1x16x384xf32>
      %25 = vector.shape_cast %24 : vector<1x16x384xf32> to vector<16x384xf32>
      %26 = arith.truncf %arg13 : vector<16x128xf32> to vector<16x128xbf16>
      %c0_33 = arith.constant 0 : index
      %c0_34 = arith.constant 0 : index
      %c0_35 = arith.constant 0 : index
      %27 = vector.load %arg4[%c0_33, %c0_34, %c0_35] : memref<2x128x384xbf16, #tpu.memory_space<vmem>>, vector<1x128x384xbf16>
      %28 = vector.shape_cast %27 : vector<1x128x384xbf16> to vector<128x384xbf16>
      %cst_36 = arith.constant dense<0.000000e+00> : vector<16x384xf32>
      %29 = tpu.matmul %26, %28, %cst_36 {dimension_numbers = #tpu.dot_dimension_numbers<[1], [0], [0], [1], [0, 0, 1, 1], [], []>} : vector<16x128xbf16>, vector<128x384xbf16>, vector<16x384xf32> -> vector<16x384xf32>
      %30 = vector.extract_strided_slice %25 {offsets = [0, 0], sizes = [16, 128], strides = [1, 1]} : vector<16x384xf32> to vector<16x128xf32>
      %31 = vector.extract_strided_slice %29 {offsets = [0, 0], sizes = [16, 128], strides = [1, 1]} : vector<16x384xf32> to vector<16x128xf32>
      %32 = arith.addf %30, %31 : vector<16x128xf32>
      %33 = arith.negf %32 : vector<16x128xf32>
      %34 = math.exp %33 : vector<16x128xf32>
      %cst_37 = arith.constant 1.000000e+00 : f32
      %35 = vector.broadcast %cst_37 : f32 to vector<16x128xf32>
      %36 = arith.addf %35, %34 : vector<16x128xf32>
      %37 = arith.divf %35, %36 : vector<16x128xf32>
      %38 = vector.extract_strided_slice %25 {offsets = [0, 128], sizes = [16, 128], strides = [1, 1]} : vector<16x384xf32> to vector<16x128xf32>
      %39 = vector.extract_strided_slice %29 {offsets = [0, 128], sizes = [16, 128], strides = [1, 1]} : vector<16x384xf32> to vector<16x128xf32>
      %40 = arith.addf %38, %39 : vector<16x128xf32>
      %41 = arith.negf %40 : vector<16x128xf32>
      %42 = math.exp %41 : vector<16x128xf32>
      %cst_38 = arith.constant 1.000000e+00 : f32
      %43 = vector.broadcast %cst_38 : f32 to vector<16x128xf32>
      %44 = arith.addf %43, %42 : vector<16x128xf32>
      %45 = arith.divf %43, %44 : vector<16x128xf32>
      %46 = vector.extract_strided_slice %25 {offsets = [0, 256], sizes = [16, 128], strides = [1, 1]} : vector<16x384xf32> to vector<16x128xf32>
      %47 = vector.extract_strided_slice %29 {offsets = [0, 256], sizes = [16, 128], strides = [1, 1]} : vector<16x384xf32> to vector<16x128xf32>
      %48 = vector.broadcast %3 : vector<1x128xf32> to vector<16x128xf32>
      %49 = arith.addf %47, %48 : vector<16x128xf32>
      %50 = arith.mulf %37, %49 : vector<16x128xf32>
      %51 = arith.addf %46, %50 : vector<16x128xf32>
      %52 = math.tanh %51 : vector<16x128xf32>
      %53 = arith.subf %arg13, %52 : vector<16x128xf32>
      %54 = arith.mulf %45, %53 : vector<16x128xf32>
      %55 = arith.addf %52, %54 : vector<16x128xf32>
      %56 = arith.truncf %55 : vector<16x128xf32> to vector<16x128xbf16>
      %57 = arith.index_cast %arg12 : i32 to index
      %c0_39 = arith.constant 0 : index
      %c0_40 = arith.constant 0 : index
      %58 = vector.load %arg10[%57, %c0_39, %c0_40] : memref<8x16x128xbf16, #tpu.memory_space<vmem>>, vector<1x16x128xbf16>
      %59 = vector.shape_cast %58 : vector<1x16x128xbf16> to vector<16x128xbf16>
      %60 = vector.shape_cast %56 : vector<16x128xbf16> to vector<1x16x128xbf16>
      tpu.vector_store %arg10[%57, %c0_39, %c0_40], %60 {strides = array<i32>} : memref<8x16x128xbf16, #tpu.memory_space<vmem>>, vector<1x16x128xbf16>,
      scf.yield %55 : vector<16x128xf32>
    }
    %c8_i32_9 = arith.constant 8 : i32
    %c1 = arith.constant 1 : index
    %c0_10 = arith.constant 0 : index
    %c0_11 = arith.constant 0 : index
    %8 = vector.load %arg5[%c1, %c0_10, %c0_11] : memref<2x1x384xf32, #tpu.memory_space<vmem>>, vector<1x1x384xf32>
    %9 = vector.shape_cast %8 : vector<1x1x384xf32> to vector<1x384xf32>
    %c1_12 = arith.constant 1 : index
    %c0_13 = arith.constant 0 : index
    %c0_14 = arith.constant 0 : index
    %10 = vector.load %arg6[%c1_12, %c0_13, %c0_14] : memref<2x1x128xf32, #tpu.memory_space<vmem>>, vector<1x1x128xf32>
    %11 = vector.shape_cast %10 : vector<1x1x128xf32> to vector<1x128xf32>
    %c0_i32_15 = arith.constant 0 : i32
    %c8_i32_16 = arith.constant 8 : i32
    %12 = arith.addi %c0_i32_15, %c8_i32_16 : i32
    %c1_i32_17 = arith.constant 1 : i32
    scf.for %arg12 = %c0_i32_15 to %12 step %c1_i32_17  : i32 {
      %23 = arith.index_cast %arg12 : i32 to index
      %c0_31 = arith.constant 0 : index
      %c0_32 = arith.constant 0 : index
      %24 = vector.load %arg10[%23, %c0_31, %c0_32] : memref<8x16x128xbf16, #tpu.memory_space<vmem>>, vector<1x16x128xbf16>
      %25 = vector.shape_cast %24 : vector<1x16x128xbf16> to vector<16x128xbf16>
      %c0_33 = arith.constant 0 : index
      %c0_34 = arith.constant 0 : index
      %c0_35 = arith.constant 0 : index
      %26 = vector.load %arg3[%c0_33, %c0_34, %c0_35] : memref<1x128x384xbf16, #tpu.memory_space<vmem>>, vector<1x128x384xbf16>
      %27 = vector.shape_cast %26 : vector<1x128x384xbf16> to vector<128x384xbf16>
      %cst_36 = arith.constant dense<0.000000e+00> : vector<16x384xf32>
      %28 = tpu.matmul %25, %27, %cst_36 {dimension_numbers = #tpu.dot_dimension_numbers<[1], [0], [0], [1], [0, 0, 1, 1], [], []>} : vector<16x128xbf16>, vector<128x384xbf16>, vector<16x384xf32> -> vector<16x384xf32>
      %29 = vector.broadcast %9 : vector<1x384xf32> to vector<16x384xf32>
      %30 = arith.addf %28, %29 : vector<16x384xf32>
      %31 = arith.index_cast %arg12 : i32 to index
      %c0_37 = arith.constant 0 : index
      %c0_38 = arith.constant 0 : index
      %32 = vector.load %arg11[%31, %c0_37, %c0_38] : memref<8x16x384xf32, #tpu.memory_space<vmem>>, vector<1x16x384xf32>
      %33 = vector.shape_cast %32 : vector<1x16x384xf32> to vector<16x384xf32>
      %34 = vector.shape_cast %30 : vector<16x384xf32> to vector<1x16x384xf32>
      tpu.vector_store %arg11[%31, %c0_37, %c0_38], %34 {strides = array<i32>} : memref<8x16x384xf32, #tpu.memory_space<vmem>>, vector<1x16x384xf32>,
    }
    %c8_i32_18 = arith.constant 8 : i32
    %cst_19 = arith.constant 0.000000e+00 : f32
    %13 = vector.broadcast %cst_19 : f32 to vector<16x128xf32>
    %c0_i32_20 = arith.constant 0 : i32
    %c8_i32_21 = arith.constant 8 : i32
    %14 = arith.addi %c0_i32_20, %c8_i32_21 : i32
    %c1_i32_22 = arith.constant 1 : i32
    %15 = scf.for %arg12 = %c0_i32_20 to %14 step %c1_i32_22 iter_args(%arg13 = %13) -> (vector<16x128xf32>)  : i32 {
      %23 = arith.index_cast %arg12 : i32 to index
      %c0_31 = arith.constant 0 : index
      %c0_32 = arith.constant 0 : index
      %24 = vector.load %arg11[%23, %c0_31, %c0_32] : memref<8x16x384xf32, #tpu.memory_space<vmem>>, vector<1x16x384xf32>
      %25 = vector.shape_cast %24 : vector<1x16x384xf32> to vector<16x384xf32>
      %26 = arith.truncf %arg13 : vector<16x128xf32> to vector<16x128xbf16>
      %c1_33 = arith.constant 1 : index
      %c0_34 = arith.constant 0 : index
      %c0_35 = arith.constant 0 : index
      %27 = vector.load %arg4[%c1_33, %c0_34, %c0_35] : memref<2x128x384xbf16, #tpu.memory_space<vmem>>, vector<1x128x384xbf16>
      %28 = vector.shape_cast %27 : vector<1x128x384xbf16> to vector<128x384xbf16>
      %cst_36 = arith.constant dense<0.000000e+00> : vector<16x384xf32>
      %29 = tpu.matmul %26, %28, %cst_36 {dimension_numbers = #tpu.dot_dimension_numbers<[1], [0], [0], [1], [0, 0, 1, 1], [], []>} : vector<16x128xbf16>, vector<128x384xbf16>, vector<16x384xf32> -> vector<16x384xf32>
      %30 = vector.extract_strided_slice %25 {offsets = [0, 0], sizes = [16, 128], strides = [1, 1]} : vector<16x384xf32> to vector<16x128xf32>
      %31 = vector.extract_strided_slice %29 {offsets = [0, 0], sizes = [16, 128], strides = [1, 1]} : vector<16x384xf32> to vector<16x128xf32>
      %32 = arith.addf %30, %31 : vector<16x128xf32>
      %33 = arith.negf %32 : vector<16x128xf32>
      %34 = math.exp %33 : vector<16x128xf32>
      %cst_37 = arith.constant 1.000000e+00 : f32
      %35 = vector.broadcast %cst_37 : f32 to vector<16x128xf32>
      %36 = arith.addf %35, %34 : vector<16x128xf32>
      %37 = arith.divf %35, %36 : vector<16x128xf32>
      %38 = vector.extract_strided_slice %25 {offsets = [0, 128], sizes = [16, 128], strides = [1, 1]} : vector<16x384xf32> to vector<16x128xf32>
      %39 = vector.extract_strided_slice %29 {offsets = [0, 128], sizes = [16, 128], strides = [1, 1]} : vector<16x384xf32> to vector<16x128xf32>
      %40 = arith.addf %38, %39 : vector<16x128xf32>
      %41 = arith.negf %40 : vector<16x128xf32>
      %42 = math.exp %41 : vector<16x128xf32>
      %cst_38 = arith.constant 1.000000e+00 : f32
      %43 = vector.broadcast %cst_38 : f32 to vector<16x128xf32>
      %44 = arith.addf %43, %42 : vector<16x128xf32>
      %45 = arith.divf %43, %44 : vector<16x128xf32>
      %46 = vector.extract_strided_slice %25 {offsets = [0, 256], sizes = [16, 128], strides = [1, 1]} : vector<16x384xf32> to vector<16x128xf32>
      %47 = vector.extract_strided_slice %29 {offsets = [0, 256], sizes = [16, 128], strides = [1, 1]} : vector<16x384xf32> to vector<16x128xf32>
      %48 = vector.broadcast %11 : vector<1x128xf32> to vector<16x128xf32>
      %49 = arith.addf %47, %48 : vector<16x128xf32>
      %50 = arith.mulf %37, %49 : vector<16x128xf32>
      %51 = arith.addf %46, %50 : vector<16x128xf32>
      %52 = math.tanh %51 : vector<16x128xf32>
      %53 = arith.subf %arg13, %52 : vector<16x128xf32>
      %54 = arith.mulf %45, %53 : vector<16x128xf32>
      %55 = arith.addf %52, %54 : vector<16x128xf32>
      scf.yield %55 : vector<16x128xf32>
    }
    %c8_i32_23 = arith.constant 8 : i32
    %16 = arith.truncf %15 : vector<16x128xf32> to vector<16x128xbf16>
    %c0_24 = arith.constant 0 : index
    %c0_25 = arith.constant 0 : index
    %17 = vector.load %arg7[%c0_24, %c0_25] : memref<128x128xbf16, #tpu.memory_space<vmem>>, vector<128x128xbf16>
    %cst_26 = arith.constant dense<0.000000e+00> : vector<16x128xf32>
    %18 = tpu.matmul %16, %17, %cst_26 {dimension_numbers = #tpu.dot_dimension_numbers<[1], [0], [0], [1], [0, 0, 1, 1], [], []>} : vector<16x128xbf16>, vector<128x128xbf16>, vector<16x128xf32> -> vector<16x128xf32>
    %c0_27 = arith.constant 0 : index
    %c0_28 = arith.constant 0 : index
    %19 = vector.load %arg8[%c0_27, %c0_28] : memref<1x128xf32, #tpu.memory_space<vmem>>, vector<1x128xf32>
    %20 = vector.broadcast %19 : vector<1x128xf32> to vector<16x128xf32>
    %21 = arith.addf %18, %20 : vector<16x128xf32>
    %c0_29 = arith.constant 0 : index
    %c0_30 = arith.constant 0 : index
    %22 = vector.load %arg9[%c0_29, %c0_30] : memref<16x128xf32, #tpu.memory_space<vmem>>, vector<16x128xf32>
    tpu.vector_store %arg9[%c0_29, %c0_30], %21 {strides = array<i32>} : memref<16x128xf32, #tpu.memory_space<vmem>>, vector<16x128xf32>,
    return
  }
  func.func @transform_0(%arg0: i32) -> (i32, i32, i32) {
    %c0_i32 = arith.constant 0 : i32
    %c0_i32_0 = arith.constant 0 : i32
    %c0_i32_1 = arith.constant 0 : i32
    return %c0_i32, %arg0, %c0_i32_0 : i32, i32, i32
  }
  func.func @transform_1(%arg0: i32) -> (i32, i32) {
    %c0_i32 = arith.constant 0 : i32
    %c0_i32_0 = arith.constant 0 : i32
    %c0_i32_1 = arith.constant 0 : i32
    return %c0_i32, %c0_i32_0 : i32, i32
  }
  func.func @transform_2(%arg0: i32) -> (i32, i32, i32) {
    %c0_i32 = arith.constant 0 : i32
    %c0_i32_0 = arith.constant 0 : i32
    %c0_i32_1 = arith.constant 0 : i32
    %c0_i32_2 = arith.constant 0 : i32
    return %c0_i32, %c0_i32_0, %c0_i32_1 : i32, i32, i32
  }
  func.func @transform_3(%arg0: i32) -> (i32, i32, i32) {
    %c0_i32 = arith.constant 0 : i32
    %c0_i32_0 = arith.constant 0 : i32
    %c0_i32_1 = arith.constant 0 : i32
    %c0_i32_2 = arith.constant 0 : i32
    return %c0_i32, %c0_i32_0, %c0_i32_1 : i32, i32, i32
  }
  func.func @transform_4(%arg0: i32) -> (i32, i32, i32) {
    %c0_i32 = arith.constant 0 : i32
    %c0_i32_0 = arith.constant 0 : i32
    %c0_i32_1 = arith.constant 0 : i32
    %c0_i32_2 = arith.constant 0 : i32
    return %c0_i32, %c0_i32_0, %c0_i32_1 : i32, i32, i32
  }
  func.func @transform_5(%arg0: i32) -> (i32, i32, i32) {
    %c0_i32 = arith.constant 0 : i32
    %c0_i32_0 = arith.constant 0 : i32
    %c0_i32_1 = arith.constant 0 : i32
    %c0_i32_2 = arith.constant 0 : i32
    return %c0_i32, %c0_i32_0, %c0_i32_1 : i32, i32, i32
  }
  func.func @transform_6(%arg0: i32) -> (i32, i32) {
    %c0_i32 = arith.constant 0 : i32
    %c0_i32_0 = arith.constant 0 : i32
    %c0_i32_1 = arith.constant 0 : i32
    return %c0_i32, %c0_i32_0 : i32, i32
  }
  func.func @transform_7(%arg0: i32) -> (i32, i32) {
    %c0_i32 = arith.constant 0 : i32
    %c0_i32_0 = arith.constant 0 : i32
    %c0_i32_1 = arith.constant 0 : i32
    return %c0_i32, %c0_i32_0 : i32, i32
  }
  func.func @transform_8(%arg0: i32) -> (i32, i32) {
    %c0_i32 = arith.constant 0 : i32
    %c0_i32_0 = arith.constant 0 : i32
    return %arg0, %c0_i32 : i32, i32
  }
}

</mosaic_0001>

<llo_original>
// kernel: tpu_custom_call.1
$region0: #{tpu_custom_call.1}
  #allocation0 [shape = 'u32[]', space=smem, size = 0x4, offset = 0x4, fixed_abs, tag = 'smem constant byte address 0x4 - core index']
  #allocation1 [shape = 'u32[144,128]{1,0:T(1,128)}', space=vmem, size = 0x12000, scoped, tag = 'internal scratch']
  #allocation2 [shape = 'bf16[8,16,128]{2,1,0:T(16,128)(2,1)}', space=vmem, size = 0x8000, scoped, tag = 'scratch operand']
  #allocation3 [shape = 'f32[8,16,384]{2,1,0:T(8,128)}', space=vmem, size = 0x30000, scoped, tag = 'scratch operand']
  %s0 = inlined_call_operand.vmem [shape: bf16[8,16,4], index: 0, kind: input, shape index: {}]
  %s1 = inlined_call_operand.vmem [shape: bf16[4,384], index: 1, kind: input, shape index: {}]
  %s2 = inlined_call_operand.hbm [shape: bf16[1,128,384], index: 2, kind: input, shape index: {}]
  %s3 = inlined_call_operand.hbm [shape: bf16[2,128,384], index: 3, kind: input, shape index: {}]
  %s4 = inlined_call_operand.vmem [shape: f32[2,1,384], index: 4, kind: input, shape index: {}]
  %s5 = inlined_call_operand.vmem [shape: f32[2,1,128], index: 5, kind: input, shape index: {}]
  %s6 = inlined_call_operand.vmem [shape: bf16[128,128], index: 6, kind: input, shape index: {}]
  %s7 = inlined_call_operand.vmem [shape: f32[1,128], index: 7, kind: input, shape index: {}]
  %s8 = inlined_call_operand.hbm [shape: f32[16,128], index: 8, kind: output, shape index: {}]
  %s9 = sld [smem:[#allocation0]]
  $region78: #{tpu_custom_call.1} parent=0
    _
  %s11 = ssub.s32 1, %s9
  %s12 = scalar_select 0, %s11, %s9
  $region1: #{tpu_custom_call.1} parent=0
    #allocation4 [shape = 'u8[98304]{0}', space=vmem, size = 0x18000, scoped, tag = 'input window, operand 2, single buffered']
    #allocation5 [shape = 's32[1]{0}', space=sflag, size = 0x4, scoped, tag = 'scoped memory for tpu_custom_call.1']
    #allocation6 [shape = 's32[1]{0}', space=sflag, size = 0x4, scoped, tag = 'scoped memory for tpu_custom_call.1']
    #allocation7 [shape = 'u8[196608]{0}', space=vmem, size = 0x30000, scoped, tag = 'input window, operand 3, single buffered']
    #allocation8 [shape = 's32[1]{0}', space=sflag, size = 0x4, scoped, tag = 'scoped memory for tpu_custom_call.1']
    #allocation9 [shape = 'u8[8192]{0}', space=vmem, size = 0x2000, scoped, tag = 'output window, operand 0, single buffered']
    %13 = vsyncpa [#allocation5], 0
    %14 = vsyncpa [#allocation8], 0
    %15 = vsyncpa [#allocation6], 0
    // Predicated region
    $region2: #{tpu_custom_call.1} parent=1 // pred_check
      _
    $region3: #{tpu_custom_call.1} parent=1 // pred_check_branch
      %17 = sbr.rel (0) target = $region5
    $region4: #{tpu_custom_call.1} parent=1 // pred_region
      _
    $region5: #{tpu_custom_call.1} parent=1 // pred_fallthru
      _
    // Predicated region
    $region6: #{tpu_custom_call.1} parent=1 // pred_check
      _
    $region7: #{tpu_custom_call.1} parent=1 // pred_check_branch
      %19 = sbr.rel (0) target = $region9
    $region8: #{tpu_custom_call.1} parent=1 // pred_region
      _
    $region9: #{tpu_custom_call.1} parent=1 // pred_fallthru
      _
    // Predicated region
    $region10: #{tpu_custom_call.1} parent=1 // pred_check
      _
    $region11: #{tpu_custom_call.1} parent=1 // pred_check_branch
      %21 = sbr.rel (0) target = $region13
    $region12: #{tpu_custom_call.1} parent=1 // pred_region
      %s23 = ssub.s32 3072, 3072
      %24 = vsyncadd [#allocation5], %s23
      %s25 = sshll.u32 [#allocation4], 4
      %s26 = int_to_ptr.vmem [resolvable:$true] %s25
      %31 = dma.hbm_to_vmem [thread:$0]  %s2, 3072, %s26, [#allocation5], 192, 192, 12
    $region13: #{tpu_custom_call.1} parent=1 // pred_fallthru
      _
    // Predicated region
    $region14: #{tpu_custom_call.1} parent=1 // pred_check
      _
    $region15: #{tpu_custom_call.1} parent=1 // pred_check_branch
      %33 = sbr.rel (0) target = $region17
    $region16: #{tpu_custom_call.1} parent=1 // pred_region
      %s35 = ssub.s32 6144, 6144
      %36 = vsyncadd [#allocation8], %s35
      %s37 = sshll.u32 [#allocation7], 4
      %s38 = int_to_ptr.vmem [resolvable:$true] %s37
      %43 = dma.hbm_to_vmem [thread:$0]  %s3, 6144, %s38, [#allocation8], 192, 192, 12
    $region17: #{tpu_custom_call.1} parent=1 // pred_fallthru
      _
    // Predicated region
    $region18: #{tpu_custom_call.1} parent=1 // pred_check
      _
    $region19: #{tpu_custom_call.1} parent=1 // pred_check_branch
      %45 = sbr.rel (0) target = $region21
    $region20: #{tpu_custom_call.1} parent=1 // pred_region
      _
    $region21: #{tpu_custom_call.1} parent=1 // pred_fallthru
      _
    // Predicated region
    $region22: #{tpu_custom_call.1} parent=1 // pred_check
      _
    $region23: #{tpu_custom_call.1} parent=1 // pred_check_branch
      %47 = sbr.rel (0) target = $region25
    $region24: #{tpu_custom_call.1} parent=1 // pred_region
      _
    $region25: #{tpu_custom_call.1} parent=1 // pred_fallthru
      _
    // Predicated region
    $region26: #{tpu_custom_call.1} parent=1 // pred_check
      _
    $region27: #{tpu_custom_call.1} parent=1 // pred_check_branch
      %49 = sbr.rel (0) target = $region29
    $region28: #{tpu_custom_call.1} parent=1 // pred_region
      _
    $region29: #{tpu_custom_call.1} parent=1 // pred_fallthru
      _
    // Predicated region
    $region30: #{tpu_custom_call.1} parent=1 // pred_check
      _
    $region31: #{tpu_custom_call.1} parent=1 // pred_check_branch
      %51 = sbr.rel (0) target = $region33
    $region32: #{tpu_custom_call.1} parent=1 // pred_region
      _
    $region33: #{tpu_custom_call.1} parent=1 // pred_fallthru
      _
    // Predicated region
    $region34: #{tpu_custom_call.1} parent=1 // pred_check
      _
    $region35: #{tpu_custom_call.1} parent=1 // pred_check_branch
      %53 = sbr.rel (0) target = $region37
    $region36: #{tpu_custom_call.1} parent=1 // pred_region
      %54 = dma.done [#allocation5], 3072
    $region37: #{tpu_custom_call.1} parent=1 // pred_fallthru
      _
    // Predicated region
    $region38: #{tpu_custom_call.1} parent=1 // pred_check
      _
    $region39: #{tpu_custom_call.1} parent=1 // pred_check_branch
      %56 = sbr.rel (0) target = $region41
    $region40: #{tpu_custom_call.1} parent=1 // pred_region
      %57 = dma.done [#allocation8], 6144
    $region41: #{tpu_custom_call.1} parent=1 // pred_fallthru
      _
    %v59 = vld [vmem:[%s4] sm:$0x7]
    %v60 = vld [vmem:[%s5] sm:$0x1]
    loop: start=0, step=1, limit=8
    $region42: #{tpu_custom_call.1} parent=1 // loop_pre_header
      _
    $region43: #{tpu_custom_call.1} parent=1 // loop_header
      %s62 = sphi 0, %s66
      %p63 = scmp.ge.s32.totalorder %s62, 8
    $region44: #{tpu_custom_call.1} parent=1 // loop_header_branch
      %65 = sbr.rel (%p63) target = $region48
    $region45: #{tpu_custom_call.1} parent=1 // loop_body
      %s67 = smul.u32 %s62, 2
      %s68 = smul.addr %s67, 4
      %s69 = scalar_lea.vmem %s0, %s68
      %v70 = vld [vmem:[%s69] sm:$0xf]
      %v71 = vld [vmem:[%s69 + $0x4] sm:$0xf]
      %v72 = vld [vmem:[%s1] sm:$0x3f]
      %v74 = vlaneseq
      %v75 = vshrl.u32 %v74, 7
      %v76 = vsub.s32 0, %v75
      %v77 = vrot.slane %v59, %v76
      %v78 = vlaneseq
      %v79 = vshrl.u32 %v78, 7
      %v80 = vsub.s32 1, %v79
      %v81 = vrot.slane %v59, %v80
      %v82 = vlaneseq
      %v83 = vshrl.u32 %v82, 7
      %v84 = vsub.s32 2, %v83
      %v85 = vrot.slane %v59, %v84
      %v91 = vunpack.c.l.b16 %v70
      %v92 = vunpack.c.l.b16 %v71
      %v93 = vpack.c.b16 %v92, %v91
      %v95 = vcombine.high %v72, %v72
      %v97 = vunpack.c.l.s4 1983009808
      %v98 = vunpack.c.0.s8 %v97
      %v99 = vlaneseq
      %v100 = vshrl.u32 %v99, 7
      %v101 = vsub.s32 %v98, %v100
      %v102 = vrot.slane %v72, %v101
      %v104 = vunpack.c.l.s4 1983009808
      %v105 = vunpack.c.0.s8 %v104
      %v106 = vlaneseq
      %v107 = vshrl.u32 %v106, 7
      %v108 = vsub.s32 %v105, %v107
      %v109 = vrot.slane %v95, %v108
      %v110 = vcombine.high %v102, %v102
      %vm111 = vcmask 31744
      %v113 = vsel %vm111, %v93, 0
      %vm115 = vcmask 1041408
      %v117 = vsel %vm115, %v102, 0
      %v120 = vsel %vm115, %v110, 0
      %v123 = vsel %vm115, %v109, 0
      %125 = vmatprep.subr.bf16.mxu0 %v120
      %126 = vmatpush1.bf16.msra.mxu0 %v117
      %127 = vmatprep.subr.bf16.mxu0 0
      %128 = vmatpush1.bf16.msra.mxu0 0
      %129 = vmatprep.subr.bf16.mxu0 0
      %130 = vmatpush1.bf16.msra.mxu0 0
      %131 = vmatprep.subr.bf16.mxu0 0
      %132 = vmatpush1.bf16.msra.mxu0 0
      %133 = vmatprep.subr.bf16.mxu0 0
      %134 = vmatpush1.bf16.msra.mxu0 0
      %135 = vmatprep.subr.bf16.mxu0 0
      %136 = vmatpush1.bf16.msra.mxu0 0
      %137 = vmatprep.subr.bf16.mxu0 0
      %138 = vmatpush1.bf16.msra.mxu0 0
      %139 = vmatprep.subr.bf16.mxu0 0
      %140 = vmatpush1.bf16.msra.mxu0 0
      %141 = vmatprep.subr.bf16.mxu0 0
      %142 = vmatpush1.bf16.msra.mxu0 0
      %143 = vmatprep.subr.bf16.mxu0 0
      %144 = vmatpush1.bf16.msra.mxu0 0
      %145 = vmatprep.subr.bf16.mxu0 0
      %146 = vmatpush1.bf16.msra.mxu0 0
      %147 = vmatprep.subr.bf16.mxu0 0
      %148 = vmatpush1.bf16.msra.mxu0 0
      %149 = vmatprep.subr.bf16.mxu0 0
      %150 = vmatpush1.bf16.msra.mxu0 0
      %151 = vmatprep.subr.bf16.mxu0 0
      %152 = vmatpush1.bf16.msra.mxu0 0
      %153 = vmatprep.subr.bf16.mxu0 0
      %154 = vmatpush1.bf16.msra.mxu0 0
      %155 = vmatprep.subr.bf16.mxu0 0
      %156 = vmatpush1.bf16.msra.mxu0 0
      %157 = vmatprep.mubr.bf16.mxu0 0
      %158 = vmatmul.mubr.bf16.gmra.mrb[0].mxu0 %v113
      %v159 = vpop.f32.mrb[0].mxu0
      %v160 = vadd.f32 %v77, %v159
      %v161 = vpop.f32.mrb[0].mxu0
      %v162 = vadd.f32 %v81, %v161
      %v163 = vpop.f32.mrb[0].mxu0
      %v164 = vadd.f32 %v77, %v163
      %v165 = vpop.f32.mrb[0].mxu0
      %v166 = vadd.f32 %v81, %v165
      %167 = vdwg.mxu0
      %168 = vmatprep.subr.bf16.mxu0 0
      %169 = vmatpush1.bf16.msra.mxu0 %v123
      %170 = vmatprep.subr.bf16.mxu0 0
      %171 = vmatpush1.bf16.msra.mxu0 0
      %172 = vmatprep.subr.bf16.mxu0 0
      %173 = vmatpush1.bf16.msra.mxu0 0
      %174 = vmatprep.subr.bf16.mxu0 0
      %175 = vmatpush1.bf16.msra.mxu0 0
      %176 = vmatprep.subr.bf16.mxu0 0
      %177 = vmatpush1.bf16.msra.mxu0 0
      %178 = vmatprep.subr.bf16.mxu0 0
      %179 = vmatpush1.bf16.msra.mxu0 0
      %180 = vmatprep.subr.bf16.mxu0 0
      %181 = vmatpush1.bf16.msra.mxu0 0
      %182 = vmatprep.subr.bf16.mxu0 0
      %183 = vmatpush1.bf16.msra.mxu0 0
      %184 = vmatprep.subr.bf16.mxu0 0
      %185 = vmatpush1.bf16.msra.mxu0 0
      %186 = vmatprep.subr.bf16.mxu0 0
      %187 = vmatpush1.bf16.msra.mxu0 0
      %188 = vmatprep.subr.bf16.mxu0 0
      %189 = vmatpush1.bf16.msra.mxu0 0
      %190 = vmatprep.subr.bf16.mxu0 0
      %191 = vmatpush1.bf16.msra.mxu0 0
      %192 = vmatprep.subr.bf16.mxu0 0
      %193 = vmatpush1.bf16.msra.mxu0 0
      %194 = vmatprep.subr.bf16.mxu0 0
      %195 = vmatpush1.bf16.msra.mxu0 0
      %196 = vmatprep.subr.bf16.mxu0 0
      %197 = vmatpush1.bf16.msra.mxu0 0
      %198 = vmatprep.subr.bf16.mxu0 0
      %199 = vmatpush1.bf16.msra.mxu0 0
      %200 = vmatprep.mubr.bf16.mxu0 0
      %201 = vmatmul.mubr.bf16.gmra.mrb[0].mxu0 %v113
      %v202 = vpop.f32.mrb[0].mxu0
      %v203 = vadd.f32 %v85, %v202
      %v204 = vpop.f32.mrb[0].mxu0
      %v205 = vpop.f32.mrb[0].mxu0
      %v206 = vadd.f32 %v85, %v205
      %v207 = vpop.f32.mrb[0].mxu0
      %208 = vdwg.mxu0
      %s209 = smul.u32 %s62, 6
      %s210 = smul.addr %s209, 8
      %s211 = scalar_lea.vmem [#allocation3], %s210
      %212 = vst [vmem:[%s211] sm:$0xff] %v160
      %213 = vst [vmem:[%s211 + $0x8] sm:$0xff] %v162
      %214 = vst [vmem:[%s211 + $0x10] sm:$0xff] %v203
      %215 = vst [vmem:[%s211 + $0x18] sm:$0xff] %v164
      %216 = vst [vmem:[%s211 + $0x20] sm:$0xff] %v166
      %217 = vst [vmem:[%s211 + $0x28] sm:$0xff] %v206
    $region46: #{tpu_custom_call.1} parent=1 // loop_footer
      %s66 = sadd.s32 1, %s62
    $region47: #{tpu_custom_call.1} parent=1 // loop_footer_branch
      %61 = sbr.rel target = $region43
    $region48: #{tpu_custom_call.1} parent=1 // loop_exit
      _
    loop: start=0, step=1, limit=8
    $region49: #{tpu_custom_call.1} parent=1 // loop_pre_header
      _
    $region50: #{tpu_custom_call.1} parent=1 // loop_header
      %s219 = sphi 0, %s223
      %p220 = scmp.ge.s32.totalorder %s219, 8
      %v224 = vphi 0.0, %v526
      %v225 = vphi 0.0, %v527
    $region51: #{tpu_custom_call.1} parent=1 // loop_header_branch
      %222 = sbr.rel (%p220) target = $region55
    $region52: #{tpu_custom_call.1} parent=1 // loop_body
      %s226 = smul.u32 %s219, 6
      %s227 = smul.addr %s226, 8
      %s228 = scalar_lea.vmem [#allocation3], %s227
      %v229 = vld [vmem:[%s228] sm:$0xff]
      %v230 = vld [vmem:[%s228 + $0x8] sm:$0xff]
      %v231 = vld [vmem:[%s228 + $0x10] sm:$0xff]
      %v232 = vld [vmem:[%s228 + $0x18] sm:$0xff]
      %v233 = vld [vmem:[%s228 + $0x20] sm:$0xff]
      %v234 = vld [vmem:[%s228 + $0x28] sm:$0xff]
      %v235 = vpack.c.bf16 %v225, %v224
      %v236 = vld [vmem:[#allocation7] sm:$0xff]
      %v237 = vld [vmem:[#allocation7 + $0x8] sm:$0xf]
      %v238 = vld [vmem:[#allocation7 + $0xc] sm:$0xff]
      %v239 = vld [vmem:[#allocation7 + $0x14] sm:$0xf]
      %v240 = vld [vmem:[#allocation7 + $0x18] sm:$0xff]
      %v241 = vld [vmem:[#allocation7 + $0x20] sm:$0xf]
      %v242 = vld [vmem:[#allocation7 + $0x24] sm:$0xff]
      %v243 = vld [vmem:[#allocation7 + $0x2c] sm:$0xf]
      %v244 = vld [vmem:[#allocation7 + $0x30] sm:$0xff]
      %v245 = vld [vmem:[#allocation7 + $0x38] sm:$0xf]
      %v246 = vld [vmem:[#allocation7 + $0x3c] sm:$0xff]
      %v247 = vld [vmem:[#allocation7 + $0x44] sm:$0xf]
      %v248 = vld [vmem:[#allocation7 + $0x48] sm:$0xff]
      %v249 = vld [vmem:[#allocation7 + $0x50] sm:$0xf]
      %v250 = vld [vmem:[#allocation7 + $0x54] sm:$0xff]
      %v251 = vld [vmem:[#allocation7 + $0x5c] sm:$0xf]
      %v252 = vld [vmem:[#allocation7 + $0x60] sm:$0xff]
      %v253 = vld [vmem:[#allocation7 + $0x68] sm:$0xf]
      %v254 = vld [vmem:[#allocation7 + $0x6c] sm:$0xff]
      %v255 = vld [vmem:[#allocation7 + $0x74] sm:$0xf]
      %v256 = vld [vmem:[#allocation7 + $0x78] sm:$0xff]
      %v257 = vld [vmem:[#allocation7 + $0x80] sm:$0xf]
      %v258 = vld [vmem:[#allocation7 + $0x84] sm:$0xff]
      %v259 = vld [vmem:[#allocation7 + $0x8c] sm:$0xf]
      %v260 = vld [vmem:[#allocation7 + $0x90] sm:$0xff]
      %v261 = vld [vmem:[#allocation7 + $0x98] sm:$0xf]
      %v262 = vld [vmem:[#allocation7 + $0x9c] sm:$0xff]
      %v263 = vld [vmem:[#allocation7 + $0xa4] sm:$0xf]
      %v264 = vld [vmem:[#allocation7 + $0xa8] sm:$0xff]
      %v265 = vld [vmem:[#allocation7 + $0xb0] sm:$0xf]
      %v266 = vld [vmem:[#allocation7 + $0xb4] sm:$0xff]
      %v267 = vld [vmem:[#allocation7 + $0xbc] sm:$0xf]
      %v300 = vunpack.c.l.b16 %v236
      %v301 = vunpack.c.h.b16 %v236
      %v302 = vunpack.c.l.b16 %v237
      %v303 = vunpack.c.l.b16 %v238
      %v304 = vunpack.c.h.b16 %v238
      %v305 = vunpack.c.l.b16 %v239
      %v306 = vunpack.c.l.b16 %v240
      %v307 = vunpack.c.h.b16 %v240
      %v308 = vunpack.c.l.b16 %v241
      %v309 = vunpack.c.l.b16 %v242
      %v310 = vunpack.c.h.b16 %v242
      %v311 = vunpack.c.l.b16 %v243
      %v312 = vunpack.c.l.b16 %v244
      %v313 = vunpack.c.h.b16 %v244
      %v314 = vunpack.c.l.b16 %v245
      %v315 = vunpack.c.l.b16 %v246
      %v316 = vunpack.c.h.b16 %v246
      %v317 = vunpack.c.l.b16 %v247
      %v318 = vunpack.c.l.b16 %v248
      %v319 = vunpack.c.h.b16 %v248
      %v320 = vunpack.c.l.b16 %v249
      %v321 = vunpack.c.l.b16 %v250
      %v322 = vunpack.c.h.b16 %v250
      %v323 = vunpack.c.l.b16 %v251
      %v324 = vunpack.c.l.b16 %v252
      %v325 = vunpack.c.h.b16 %v252
      %v326 = vunpack.c.l.b16 %v253
      %v327 = vunpack.c.l.b16 %v254
      %v328 = vunpack.c.h.b16 %v254
      %v329 = vunpack.c.l.b16 %v255
      %v330 = vunpack.c.l.b16 %v256
      %v331 = vunpack.c.h.b16 %v256
      %v332 = vunpack.c.l.b16 %v257
      %v333 = vunpack.c.l.b16 %v258
      %v334 = vunpack.c.h.b16 %v258
      %v335 = vunpack.c.l.b16 %v259
      %v336 = vunpack.c.l.b16 %v260
      %v337 = vunpack.c.h.b16 %v260
      %v338 = vunpack.c.l.b16 %v261
      %v339 = vunpack.c.l.b16 %v262
      %v340 = vunpack.c.h.b16 %v262
      %v341 = vunpack.c.l.b16 %v263
      %v342 = vunpack.c.l.b16 %v264
      %v343 = vunpack.c.h.b16 %v264
      %v344 = vunpack.c.l.b16 %v265
      %v345 = vunpack.c.l.b16 %v266
      %v346 = vunpack.c.h.b16 %v266
      %v347 = vunpack.c.l.b16 %v267
      %v348 = vpack.c.b16 %v303, %v300
      %v349 = vpack.c.b16 %v304, %v301
      %v350 = vpack.c.b16 %v305, %v302
      %v351 = vpack.c.b16 %v309, %v306
      %v352 = vpack.c.b16 %v310, %v307
      %v353 = vpack.c.b16 %v311, %v308
      %v354 = vpack.c.b16 %v315, %v312
      %v355 = vpack.c.b16 %v316, %v313
      %v356 = vpack.c.b16 %v317, %v314
      %v357 = vpack.c.b16 %v321, %v318
      %v358 = vpack.c.b16 %v322, %v319
      %v359 = vpack.c.b16 %v323, %v320
      %v360 = vpack.c.b16 %v327, %v324
      %v361 = vpack.c.b16 %v328, %v325
      %v362 = vpack.c.b16 %v329, %v326
      %v363 = vpack.c.b16 %v333, %v330
      %v364 = vpack.c.b16 %v334, %v331
      %v365 = vpack.c.b16 %v335, %v332
      %v366 = vpack.c.b16 %v339, %v336
      %v367 = vpack.c.b16 %v340, %v337
      %v368 = vpack.c.b16 %v341, %v338
      %v369 = vpack.c.b16 %v345, %v342
      %v370 = vpack.c.b16 %v346, %v343
      %v371 = vpack.c.b16 %v347, %v344
      %396 = vmatprep.subr.bf16.mxu0 %v349
      %397 = vmatpush1.bf16.msra.mxu0 %v348
      %398 = vmatprep.subr.bf16.mxu0 %v352
      %399 = vmatpush1.bf16.msra.mxu0 %v351
      %400 = vmatprep.subr.bf16.mxu0 %v355
      %401 = vmatpush1.bf16.msra.mxu0 %v354
      %402 = vmatprep.subr.bf16.mxu0 %v358
      %403 = vmatpush1.bf16.msra.mxu0 %v357
      %404 = vmatprep.subr.bf16.mxu0 %v361
      %405 = vmatpush1.bf16.msra.mxu0 %v360
      %406 = vmatprep.subr.bf16.mxu0 %v364
      %407 = vmatpush1.bf16.msra.mxu0 %v363
      %408 = vmatprep.subr.bf16.mxu0 %v367
      %409 = vmatpush1.bf16.msra.mxu0 %v366
      %410 = vmatprep.subr.bf16.mxu0 %v370
      %411 = vmatpush1.bf16.msra.mxu0 %v369
      %412 = vmatprep.subr.bf16.mxu0 0
      %413 = vmatpush1.bf16.msra.mxu0 0
      %414 = vmatprep.subr.bf16.mxu0 0
      %415 = vmatpush1.bf16.msra.mxu0 0
      %416 = vmatprep.subr.bf16.mxu0 0
      %417 = vmatpush1.bf16.msra.mxu0 0
      %418 = vmatprep.subr.bf16.mxu0 0
      %419 = vmatpush1.bf16.msra.mxu0 0
      %420 = vmatprep.subr.bf16.mxu0 0
      %421 = vmatpush1.bf16.msra.mxu0 0
      %422 = vmatprep.subr.bf16.mxu0 0
      %423 = vmatpush1.bf16.msra.mxu0 0
      %424 = vmatprep.subr.bf16.mxu0 0
      %425 = vmatpush1.bf16.msra.mxu0 0
      %426 = vmatprep.subr.bf16.mxu0 0
      %427 = vmatpush1.bf16.msra.mxu0 0
      %428 = vmatprep.mubr.bf16.mxu0 0
      %429 = vmatmul.mubr.bf16.gmra.mrb[0].mxu0 %v235
      %v430 = vpop.f32.mrb[0].mxu0
      %v431 = vadd.f32 0.0, %v430
      %v432 = vpop.f32.mrb[0].mxu0
      %v433 = vadd.f32 0.0, %v432
      %v434 = vpop.f32.mrb[0].mxu0
      %v435 = vadd.f32 0.0, %v434
      %v436 = vpop.f32.mrb[0].mxu0
      %v437 = vadd.f32 0.0, %v436
      %438 = vdwg.mxu0
      %439 = vmatprep.subr.bf16.mxu0 0
      %440 = vmatpush1.bf16.msra.mxu0 %v350
      %441 = vmatprep.subr.bf16.mxu0 0
      %442 = vmatpush1.bf16.msra.mxu0 %v353
      %443 = vmatprep.subr.bf16.mxu0 0
      %444 = vmatpush1.bf16.msra.mxu0 %v356
      %445 = vmatprep.subr.bf16.mxu0 0
      %446 = vmatpush1.bf16.msra.mxu0 %v359
      %447 = vmatprep.subr.bf16.mxu0 0
      %448 = vmatpush1.bf16.msra.mxu0 %v362
      %449 = vmatprep.subr.bf16.mxu0 0
      %450 = vmatpush1.bf16.msra.mxu0 %v365
      %451 = vmatprep.subr.bf16.mxu0 0
      %452 = vmatpush1.bf16.msra.mxu0 %v368
      %453 = vmatprep.subr.bf16.mxu0 0
      %454 = vmatpush1.bf16.msra.mxu0 %v371
      %455 = vmatprep.subr.bf16.mxu0 0
      %456 = vmatpush1.bf16.msra.mxu0 0
      %457 = vmatprep.subr.bf16.mxu0 0
      %458 = vmatpush1.bf16.msra.mxu0 0
      %459 = vmatprep.subr.bf16.mxu0 0
      %460 = vmatpush1.bf16.msra.mxu0 0
      %461 = vmatprep.subr.bf16.mxu0 0
      %462 = vmatpush1.bf16.msra.mxu0 0
      %463 = vmatprep.subr.bf16.mxu0 0
      %464 = vmatpush1.bf16.msra.mxu0 0
      %465 = vmatprep.subr.bf16.mxu0 0
      %466 = vmatpush1.bf16.msra.mxu0 0
      %467 = vmatprep.subr.bf16.mxu0 0
      %468 = vmatpush1.bf16.msra.mxu0 0
      %469 = vmatprep.subr.bf16.mxu0 0
      %470 = vmatpush1.bf16.msra.mxu0 0
      %471 = vmatprep.mubr.bf16.mxu0 0
      %472 = vmatmul.mubr.bf16.gmra.mrb[0].mxu0 %v235
      %v473 = vpop.f32.mrb[0].mxu0
      %v474 = vadd.f32 0.0, %v473
      %v475 = vpop.f32.mrb[0].mxu0
      %v476 = vpop.f32.mrb[0].mxu0
      %v477 = vadd.f32 0.0, %v476
      %v478 = vpop.f32.mrb[0].mxu0
      %479 = vdwg.mxu0
      %v480 = vadd.f32 %v229, %v431
      %v481 = vadd.f32 %v232, %v435
      %v482 = vxor.u32 %v480, 2147483648
      %v483 = vxor.u32 %v481, 2147483648
      %v484 = vmul.f32 %v482, 1.442695
      %v485 = vpow.pop %v484
      %v486 = vmul.f32 %v483, 1.442695
      %v487 = vpow.pop %v486
      %v488 = vadd.f32 %v485, 1.0
      %v489 = vadd.f32 %v487, 1.0
      %v490 = vrcp.pop %v488
      %v491 = vmul.f32 1.0, %v490
      %v492 = vrcp.pop %v489
      %v493 = vmul.f32 1.0, %v492
      %v494 = vadd.f32 %v230, %v433
      %v495 = vadd.f32 %v233, %v437
      %v496 = vxor.u32 %v494, 2147483648
      %v497 = vxor.u32 %v495, 2147483648
      %v498 = vmul.f32 %v496, 1.442695
      %v499 = vpow.pop %v498
      %v500 = vmul.f32 %v497, 1.442695
      %v501 = vpow.pop %v500
      %v502 = vadd.f32 %v499, 1.0
      %v503 = vadd.f32 %v501, 1.0
      %v504 = vrcp.pop %v502
      %v505 = vmul.f32 1.0, %v504
      %v506 = vrcp.pop %v503
      %v507 = vmul.f32 1.0, %v506
      %v509 = vlaneseq
      %v510 = vshrl.u32 %v509, 7
      %v511 = vsub.s32 0, %v510
      %v512 = vrot.slane %v60, %v511
      %v514 = vadd.f32 %v474, %v512
      %v515 = vadd.f32 %v477, %v512
      %v516 = vmul.f32 %v491, %v514
      %v517 = vmul.f32 %v493, %v515
      %v518 = vadd.f32 %v231, %v516
      %v519 = vadd.f32 %v234, %v517
      %v520 = vtanh.pop %v518
      %v521 = vtanh.pop %v519
      %v522 = vsub.f32 %v224, %v520
      %v523 = vsub.f32 %v225, %v521
      %v524 = vmul.f32 %v505, %v522
      %v525 = vmul.f32 %v507, %v523
      %v526 = vadd.f32 %v520, %v524
      %v527 = vadd.f32 %v521, %v525
      %v528 = vpack.c.bf16 %v527, %v526
      %s529 = smul.addr %s219, 8
      %s530 = scalar_lea.vmem [#allocation2], %s529
      %531 = vst [vmem:[%s530] sm:$0xff] %v528
    $region53: #{tpu_custom_call.1} parent=1 // loop_footer
      %s223 = sadd.s32 1, %s219
    $region54: #{tpu_custom_call.1} parent=1 // loop_footer_branch
      %218 = sbr.rel target = $region50
    $region55: #{tpu_custom_call.1} parent=1 // loop_exit
      _
    %s532 = scalar_lea.vmem %s4, 3
    %v533 = vld [vmem:[%s532] sm:$0x7]
    %s534 = scalar_lea.vmem %s5, 1
    %v535 = vld [vmem:[%s534] sm:$0x1]
    loop: start=0, step=1, limit=8
    $region56: #{tpu_custom_call.1} parent=1 // loop_pre_header
      _
    $region57: #{tpu_custom_call.1} parent=1 // loop_header
      %s537 = sphi 0, %s541
      %p538 = scmp.ge.s32.totalorder %s537, 8
    $region58: #{tpu_custom_call.1} parent=1 // loop_header_branch
      %540 = sbr.rel (%p538) target = $region62
    $region59: #{tpu_custom_call.1} parent=1 // loop_body
      %s542 = smul.addr %s537, 8
      %s543 = scalar_lea.vmem [#allocation2], %s542
      %v544 = vld [vmem:[%s543] sm:$0xff]
      %v545 = vld [vmem:[#allocation4] sm:$0xff]
      %v546 = vld [vmem:[#allocation4 + $0x8] sm:$0xf]
      %v547 = vld [vmem:[#allocation4 + $0xc] sm:$0xff]
      %v548 = vld [vmem:[#allocation4 + $0x14] sm:$0xf]
      %v549 = vld [vmem:[#allocation4 + $0x18] sm:$0xff]
      %v550 = vld [vmem:[#allocation4 + $0x20] sm:$0xf]
      %v551 = vld [vmem:[#allocation4 + $0x24] sm:$0xff]
      %v552 = vld [vmem:[#allocation4 + $0x2c] sm:$0xf]
      %v553 = vld [vmem:[#allocation4 + $0x30] sm:$0xff]
      %v554 = vld [vmem:[#allocation4 + $0x38] sm:$0xf]
      %v555 = vld [vmem:[#allocation4 + $0x3c] sm:$0xff]
      %v556 = vld [vmem:[#allocation4 + $0x44] sm:$0xf]
      %v557 = vld [vmem:[#allocation4 + $0x48] sm:$0xff]
      %v558 = vld [vmem:[#allocation4 + $0x50] sm:$0xf]
      %v559 = vld [vmem:[#allocation4 + $0x54] sm:$0xff]
      %v560 = vld [vmem:[#allocation4 + $0x5c] sm:$0xf]
      %v561 = vld [vmem:[#allocation4 + $0x60] sm:$0xff]
      %v562 = vld [vmem:[#allocation4 + $0x68] sm:$0xf]
      %v563 = vld [vmem:[#allocation4 + $0x6c] sm:$0xff]
      %v564 = vld [vmem:[#allocation4 + $0x74] sm:$0xf]
      %v565 = vld [vmem:[#allocation4 + $0x78] sm:$0xff]
      %v566 = vld [vmem:[#allocation4 + $0x80] sm:$0xf]
      %v567 = vld [vmem:[#allocation4 + $0x84] sm:$0xff]
      %v568 = vld [vmem:[#allocation4 + $0x8c] sm:$0xf]
      %v569 = vld [vmem:[#allocation4 + $0x90] sm:$0xff]
      %v570 = vld [vmem:[#allocation4 + $0x98] sm:$0xf]
      %v571 = vld [vmem:[#allocation4 + $0x9c] sm:$0xff]
      %v572 = vld [vmem:[#allocation4 + $0xa4] sm:$0xf]
      %v573 = vld [vmem:[#allocation4 + $0xa8] sm:$0xff]
      %v574 = vld [vmem:[#allocation4 + $0xb0] sm:$0xf]
      %v575 = vld [vmem:[#allocation4 + $0xb4] sm:$0xff]
      %v576 = vld [vmem:[#allocation4 + $0xbc] sm:$0xf]
      %v578 = vlaneseq
      %v579 = vshrl.u32 %v578, 7
      %v580 = vsub.s32 0, %v579
      %v581 = vrot.slane %v533, %v580
      %v582 = vlaneseq
      %v583 = vshrl.u32 %v582, 7
      %v584 = vsub.s32 1, %v583
      %v585 = vrot.slane %v533, %v584
      %v586 = vlaneseq
      %v587 = vshrl.u32 %v586, 7
      %v588 = vsub.s32 2, %v587
      %v589 = vrot.slane %v533, %v588
      %v625 = vunpack.c.l.b16 %v545
      %v626 = vunpack.c.h.b16 %v545
      %v627 = vunpack.c.l.b16 %v546
      %v628 = vunpack.c.l.b16 %v547
      %v629 = vunpack.c.h.b16 %v547
      %v630 = vunpack.c.l.b16 %v548
      %v631 = vunpack.c.l.b16 %v549
      %v632 = vunpack.c.h.b16 %v549
      %v633 = vunpack.c.l.b16 %v550
      %v634 = vunpack.c.l.b16 %v551
      %v635 = vunpack.c.h.b16 %v551
      %v636 = vunpack.c.l.b16 %v552
      %v637 = vunpack.c.l.b16 %v553
      %v638 = vunpack.c.h.b16 %v553
      %v639 = vunpack.c.l.b16 %v554
      %v640 = vunpack.c.l.b16 %v555
      %v641 = vunpack.c.h.b16 %v555
      %v642 = vunpack.c.l.b16 %v556
      %v643 = vunpack.c.l.b16 %v557
      %v644 = vunpack.c.h.b16 %v557
      %v645 = vunpack.c.l.b16 %v558
      %v646 = vunpack.c.l.b16 %v559
      %v647 = vunpack.c.h.b16 %v559
      %v648 = vunpack.c.l.b16 %v560
      %v649 = vunpack.c.l.b16 %v561
      %v650 = vunpack.c.h.b16 %v561
      %v651 = vunpack.c.l.b16 %v562
      %v652 = vunpack.c.l.b16 %v563
      %v653 = vunpack.c.h.b16 %v563
      %v654 = vunpack.c.l.b16 %v564
      %v655 = vunpack.c.l.b16 %v565
      %v656 = vunpack.c.h.b16 %v565
      %v657 = vunpack.c.l.b16 %v566
      %v658 = vunpack.c.l.b16 %v567
      %v659 = vunpack.c.h.b16 %v567
      %v660 = vunpack.c.l.b16 %v568
      %v661 = vunpack.c.l.b16 %v569
      %v662 = vunpack.c.h.b16 %v569
      %v663 = vunpack.c.l.b16 %v570
      %v664 = vunpack.c.l.b16 %v571
      %v665 = vunpack.c.h.b16 %v571
      %v666 = vunpack.c.l.b16 %v572
      %v667 = vunpack.c.l.b16 %v573
      %v668 = vunpack.c.h.b16 %v573
      %v669 = vunpack.c.l.b16 %v574
      %v670 = vunpack.c.l.b16 %v575
      %v671 = vunpack.c.h.b16 %v575
      %v672 = vunpack.c.l.b16 %v576
      %v673 = vpack.c.b16 %v628, %v625
      %v674 = vpack.c.b16 %v629, %v626
      %v675 = vpack.c.b16 %v630, %v627
      %v676 = vpack.c.b16 %v634, %v631
      %v677 = vpack.c.b16 %v635, %v632
      %v678 = vpack.c.b16 %v636, %v633
      %v679 = vpack.c.b16 %v640, %v637
      %v680 = vpack.c.b16 %v641, %v638
      %v681 = vpack.c.b16 %v642, %v639
      %v682 = vpack.c.b16 %v646, %v643
      %v683 = vpack.c.b16 %v647, %v644
      %v684 = vpack.c.b16 %v648, %v645
      %v685 = vpack.c.b16 %v652, %v649
      %v686 = vpack.c.b16 %v653, %v650
      %v687 = vpack.c.b16 %v654, %v651
      %v688 = vpack.c.b16 %v658, %v655
      %v689 = vpack.c.b16 %v659, %v656
      %v690 = vpack.c.b16 %v660, %v657
      %v691 = vpack.c.b16 %v664, %v661
      %v692 = vpack.c.b16 %v665, %v662
      %v693 = vpack.c.b16 %v666, %v663
      %v694 = vpack.c.b16 %v670, %v667
      %v695 = vpack.c.b16 %v671, %v668
      %v696 = vpack.c.b16 %v672, %v669
      %721 = vmatprep.subr.bf16.mxu0 %v674
      %722 = vmatpush1.bf16.msra.mxu0 %v673
      %723 = vmatprep.subr.bf16.mxu0 %v677
      %724 = vmatpush1.bf16.msra.mxu0 %v676
      %725 = vmatprep.subr.bf16.mxu0 %v680
      %726 = vmatpush1.bf16.msra.mxu0 %v679
      %727 = vmatprep.subr.bf16.mxu0 %v683
      %728 = vmatpush1.bf16.msra.mxu0 %v682
      %729 = vmatprep.subr.bf16.mxu0 %v686
      %730 = vmatpush1.bf16.msra.mxu0 %v685
      %731 = vmatprep.subr.bf16.mxu0 %v689
      %732 = vmatpush1.bf16.msra.mxu0 %v688
      %733 = vmatprep.subr.bf16.mxu0 %v692
      %734 = vmatpush1.bf16.msra.mxu0 %v691
      %735 = vmatprep.subr.bf16.mxu0 %v695
      %736 = vmatpush1.bf16.msra.mxu0 %v694
      %737 = vmatprep.subr.bf16.mxu0 0
      %738 = vmatpush1.bf16.msra.mxu0 0
      %739 = vmatprep.subr.bf16.mxu0 0
      %740 = vmatpush1.bf16.msra.mxu0 0
      %741 = vmatprep.subr.bf16.mxu0 0
      %742 = vmatpush1.bf16.msra.mxu0 0
      %743 = vmatprep.subr.bf16.mxu0 0
      %744 = vmatpush1.bf16.msra.mxu0 0
      %745 = vmatprep.subr.bf16.mxu0 0
      %746 = vmatpush1.bf16.msra.mxu0 0
      %747 = vmatprep.subr.bf16.mxu0 0
      %748 = vmatpush1.bf16.msra.mxu0 0
      %749 = vmatprep.subr.bf16.mxu0 0
      %750 = vmatpush1.bf16.msra.mxu0 0
      %751 = vmatprep.subr.bf16.mxu0 0
      %752 = vmatpush1.bf16.msra.mxu0 0
      %753 = vmatprep.mubr.bf16.mxu0 0
      %754 = vmatmul.mubr.bf16.gmra.mrb[0].mxu0 %v544
      %v755 = vpop.f32.mrb[0].mxu0
      %v756 = vadd.f32 %v581, %v755
      %v757 = vpop.f32.mrb[0].mxu0
      %v758 = vadd.f32 %v585, %v757
      %v759 = vpop.f32.mrb[0].mxu0
      %v760 = vadd.f32 %v581, %v759
      %v761 = vpop.f32.mrb[0].mxu0
      %v762 = vadd.f32 %v585, %v761
      %763 = vdwg.mxu0
      %764 = vmatprep.subr.bf16.mxu0 0
      %765 = vmatpush1.bf16.msra.mxu0 %v675
      %766 = vmatprep.subr.bf16.mxu0 0
      %767 = vmatpush1.bf16.msra.mxu0 %v678
      %768 = vmatprep.subr.bf16.mxu0 0
      %769 = vmatpush1.bf16.msra.mxu0 %v681
      %770 = vmatprep.subr.bf16.mxu0 0
      %771 = vmatpush1.bf16.msra.mxu0 %v684
      %772 = vmatprep.subr.bf16.mxu0 0
      %773 = vmatpush1.bf16.msra.mxu0 %v687
      %774 = vmatprep.subr.bf16.mxu0 0
      %775 = vmatpush1.bf16.msra.mxu0 %v690
      %776 = vmatprep.subr.bf16.mxu0 0
      %777 = vmatpush1.bf16.msra.mxu0 %v693
      %778 = vmatprep.subr.bf16.mxu0 0
      %779 = vmatpush1.bf16.msra.mxu0 %v696
      %780 = vmatprep.subr.bf16.mxu0 0
      %781 = vmatpush1.bf16.msra.mxu0 0
      %782 = vmatprep.subr.bf16.mxu0 0
      %783 = vmatpush1.bf16.msra.mxu0 0
      %784 = vmatprep.subr.bf16.mxu0 0
      %785 = vmatpush1.bf16.msra.mxu0 0
      %786 = vmatprep.subr.bf16.mxu0 0
      %787 = vmatpush1.bf16.msra.mxu0 0
      %788 = vmatprep.subr.bf16.mxu0 0
      %789 = vmatpush1.bf16.msra.mxu0 0
      %790 = vmatprep.subr.bf16.mxu0 0
      %791 = vmatpush1.bf16.msra.mxu0 0
      %792 = vmatprep.subr.bf16.mxu0 0
      %793 = vmatpush1.bf16.msra.mxu0 0
      %794 = vmatprep.subr.bf16.mxu0 0
      %795 = vmatpush1.bf16.msra.mxu0 0
      %796 = vmatprep.mubr.bf16.mxu0 0
      %797 = vmatmul.mubr.bf16.gmra.mrb[0].mxu0 %v544
      %v798 = vpop.f32.mrb[0].mxu0
      %v799 = vadd.f32 %v589, %v798
      %v800 = vpop.f32.mrb[0].mxu0
      %v801 = vpop.f32.mrb[0].mxu0
      %v802 = vadd.f32 %v589, %v801
      %v803 = vpop.f32.mrb[0].mxu0
      %804 = vdwg.mxu0
      %s805 = smul.u32 %s537, 6
      %s806 = smul.addr %s805, 8
      %s807 = scalar_lea.vmem [#allocation3], %s806
      %808 = vst [vmem:[%s807] sm:$0xff] %v756
      %809 = vst [vmem:[%s807 + $0x8] sm:$0xff] %v758
      %810 = vst [vmem:[%s807 + $0x10] sm:$0xff] %v799
      %811 = vst [vmem:[%s807 + $0x18] sm:$0xff] %v760
      %812 = vst [vmem:[%s807 + $0x20] sm:$0xff] %v762
      %813 = vst [vmem:[%s807 + $0x28] sm:$0xff] %v802
    $region60: #{tpu_custom_call.1} parent=1 // loop_footer
      %s541 = sadd.s32 1, %s537
    $region61: #{tpu_custom_call.1} parent=1 // loop_footer_branch
      %536 = sbr.rel target = $region57
    $region62: #{tpu_custom_call.1} parent=1 // loop_exit
      _
    loop: start=0, step=1, limit=8
    $region63: #{tpu_custom_call.1} parent=1 // loop_pre_header
      _
    $region64: #{tpu_custom_call.1} parent=1 // loop_header
      %s815 = sphi 0, %s819
      %p816 = scmp.ge.s32.totalorder %s815, 8
      %v820 = vphi 0.0, %v1123
      %v821 = vphi 0.0, %v1124
    $region65: #{tpu_custom_call.1} parent=1 // loop_header_branch
      %818 = sbr.rel (%p816) target = $region69
    $region66: #{tpu_custom_call.1} parent=1 // loop_body
      %s822 = smul.u32 %s815, 6
      %s823 = smul.addr %s822, 8
      %s824 = scalar_lea.vmem [#allocation3], %s823
      %v825 = vld [vmem:[%s824] sm:$0xff]
      %v826 = vld [vmem:[%s824 + $0x8] sm:$0xff]
      %v827 = vld [vmem:[%s824 + $0x10] sm:$0xff]
      %v828 = vld [vmem:[%s824 + $0x18] sm:$0xff]
      %v829 = vld [vmem:[%s824 + $0x20] sm:$0xff]
      %v830 = vld [vmem:[%s824 + $0x28] sm:$0xff]
      %v831 = vpack.c.bf16 %v821, %v820
      %s832 = scalar_lea.vmem [#allocation7], 192
      %v833 = vld [vmem:[%s832] sm:$0xff]
      %v834 = vld [vmem:[%s832 + $0x8] sm:$0xf]
      %v835 = vld [vmem:[%s832 + $0xc] sm:$0xff]
      %v836 = vld [vmem:[%s832 + $0x14] sm:$0xf]
      %v837 = vld [vmem:[%s832 + $0x18] sm:$0xff]
      %v838 = vld [vmem:[%s832 + $0x20] sm:$0xf]
      %v839 = vld [vmem:[%s832 + $0x24] sm:$0xff]
      %v840 = vld [vmem:[%s832 + $0x2c] sm:$0xf]
      %v841 = vld [vmem:[%s832 + $0x30] sm:$0xff]
      %v842 = vld [vmem:[%s832 + $0x38] sm:$0xf]
      %v843 = vld [vmem:[%s832 + $0x3c] sm:$0xff]
      %v844 = vld [vmem:[%s832 + $0x44] sm:$0xf]
      %v845 = vld [vmem:[%s832 + $0x48] sm:$0xff]
      %v846 = vld [vmem:[%s832 + $0x50] sm:$0xf]
      %v847 = vld [vmem:[%s832 + $0x54] sm:$0xff]
      %v848 = vld [vmem:[%s832 + $0x5c] sm:$0xf]
      %v849 = vld [vmem:[%s832 + $0x60] sm:$0xff]
      %v850 = vld [vmem:[%s832 + $0x68] sm:$0xf]
      %v851 = vld [vmem:[%s832 + $0x6c] sm:$0xff]
      %v852 = vld [vmem:[%s832 + $0x74] sm:$0xf]
      %v853 = vld [vmem:[%s832 + $0x78] sm:$0xff]
      %v854 = vld [vmem:[%s832 + $0x80] sm:$0xf]
      %v855 = vld [vmem:[%s832 + $0x84] sm:$0xff]
      %v856 = vld [vmem:[%s832 + $0x8c] sm:$0xf]
      %v857 = vld [vmem:[%s832 + $0x90] sm:$0xff]
      %v858 = vld [vmem:[%s832 + $0x98] sm:$0xf]
      %v859 = vld [vmem:[%s832 + $0x9c] sm:$0xff]
      %v860 = vld [vmem:[%s832 + $0xa4] sm:$0xf]
      %v861 = vld [vmem:[%s832 + $0xa8] sm:$0xff]
      %v862 = vld [vmem:[%s832 + $0xb0] sm:$0xf]
      %v863 = vld [vmem:[%s832 + $0xb4] sm:$0xff]
      %v864 = vld [vmem:[%s832 + $0xbc] sm:$0xf]
      %v897 = vunpack.c.l.b16 %v833
      %v898 = vunpack.c.h.b16 %v833
      %v899 = vunpack.c.l.b16 %v834
      %v900 = vunpack.c.l.b16 %v835
      %v901 = vunpack.c.h.b16 %v835
      %v902 = vunpack.c.l.b16 %v836
      %v903 = vunpack.c.l.b16 %v837
      %v904 = vunpack.c.h.b16 %v837
      %v905 = vunpack.c.l.b16 %v838
      %v906 = vunpack.c.l.b16 %v839
      %v907 = vunpack.c.h.b16 %v839
      %v908 = vunpack.c.l.b16 %v840
      %v909 = vunpack.c.l.b16 %v841
      %v910 = vunpack.c.h.b16 %v841
      %v911 = vunpack.c.l.b16 %v842
      %v912 = vunpack.c.l.b16 %v843
      %v913 = vunpack.c.h.b16 %v843
      %v914 = vunpack.c.l.b16 %v844
      %v915 = vunpack.c.l.b16 %v845
      %v916 = vunpack.c.h.b16 %v845
      %v917 = vunpack.c.l.b16 %v846
      %v918 = vunpack.c.l.b16 %v847
      %v919 = vunpack.c.h.b16 %v847
      %v920 = vunpack.c.l.b16 %v848
      %v921 = vunpack.c.l.b16 %v849
      %v922 = vunpack.c.h.b16 %v849
      %v923 = vunpack.c.l.b16 %v850
      %v924 = vunpack.c.l.b16 %v851
      %v925 = vunpack.c.h.b16 %v851
      %v926 = vunpack.c.l.b16 %v852
      %v927 = vunpack.c.l.b16 %v853
      %v928 = vunpack.c.h.b16 %v853
      %v929 = vunpack.c.l.b16 %v854
      %v930 = vunpack.c.l.b16 %v855
      %v931 = vunpack.c.h.b16 %v855
      %v932 = vunpack.c.l.b16 %v856
      %v933 = vunpack.c.l.b16 %v857
      %v934 = vunpack.c.h.b16 %v857
      %v935 = vunpack.c.l.b16 %v858
      %v936 = vunpack.c.l.b16 %v859
      %v937 = vunpack.c.h.b16 %v859
      %v938 = vunpack.c.l.b16 %v860
      %v939 = vunpack.c.l.b16 %v861
      %v940 = vunpack.c.h.b16 %v861
      %v941 = vunpack.c.l.b16 %v862
      %v942 = vunpack.c.l.b16 %v863
      %v943 = vunpack.c.h.b16 %v863
      %v944 = vunpack.c.l.b16 %v864
      %v945 = vpack.c.b16 %v900, %v897
      %v946 = vpack.c.b16 %v901, %v898
      %v947 = vpack.c.b16 %v902, %v899
      %v948 = vpack.c.b16 %v906, %v903
      %v949 = vpack.c.b16 %v907, %v904
      %v950 = vpack.c.b16 %v908, %v905
      %v951 = vpack.c.b16 %v912, %v909
      %v952 = vpack.c.b16 %v913, %v910
      %v953 = vpack.c.b16 %v914, %v911
      %v954 = vpack.c.b16 %v918, %v915
      %v955 = vpack.c.b16 %v919, %v916
      %v956 = vpack.c.b16 %v920, %v917
      %v957 = vpack.c.b16 %v924, %v921
      %v958 = vpack.c.b16 %v925, %v922
      %v959 = vpack.c.b16 %v926, %v923
      %v960 = vpack.c.b16 %v930, %v927
      %v961 = vpack.c.b16 %v931, %v928
      %v962 = vpack.c.b16 %v932, %v929
      %v963 = vpack.c.b16 %v936, %v933
      %v964 = vpack.c.b16 %v937, %v934
      %v965 = vpack.c.b16 %v938, %v935
      %v966 = vpack.c.b16 %v942, %v939
      %v967 = vpack.c.b16 %v943, %v940
      %v968 = vpack.c.b16 %v944, %v941
      %993 = vmatprep.subr.bf16.mxu0 %v946
      %994 = vmatpush1.bf16.msra.mxu0 %v945
      %995 = vmatprep.subr.bf16.mxu0 %v949
      %996 = vmatpush1.bf16.msra.mxu0 %v948
      %997 = vmatprep.subr.bf16.mxu0 %v952
      %998 = vmatpush1.bf16.msra.mxu0 %v951
      %999 = vmatprep.subr.bf16.mxu0 %v955
      %1000 = vmatpush1.bf16.msra.mxu0 %v954
      %1001 = vmatprep.subr.bf16.mxu0 %v958
      %1002 = vmatpush1.bf16.msra.mxu0 %v957
      %1003 = vmatprep.subr.bf16.mxu0 %v961
      %1004 = vmatpush1.bf16.msra.mxu0 %v960
      %1005 = vmatprep.subr.bf16.mxu0 %v964
      %1006 = vmatpush1.bf16.msra.mxu0 %v963
      %1007 = vmatprep.subr.bf16.mxu0 %v967
      %1008 = vmatpush1.bf16.msra.mxu0 %v966
      %1009 = vmatprep.subr.bf16.mxu0 0
      %1010 = vmatpush1.bf16.msra.mxu0 0
      %1011 = vmatprep.subr.bf16.mxu0 0
      %1012 = vmatpush1.bf16.msra.mxu0 0
      %1013 = vmatprep.subr.bf16.mxu0 0
      %1014 = vmatpush1.bf16.msra.mxu0 0
      %1015 = vmatprep.subr.bf16.mxu0 0
      %1016 = vmatpush1.bf16.msra.mxu0 0
      %1017 = vmatprep.subr.bf16.mxu0 0
      %1018 = vmatpush1.bf16.msra.mxu0 0
      %1019 = vmatprep.subr.bf16.mxu0 0
      %1020 = vmatpush1.bf16.msra.mxu0 0
      %1021 = vmatprep.subr.bf16.mxu0 0
      %1022 = vmatpush1.bf16.msra.mxu0 0
      %1023 = vmatprep.subr.bf16.mxu0 0
      %1024 = vmatpush1.bf16.msra.mxu0 0
      %1025 = vmatprep.mubr.bf16.mxu0 0
      %1026 = vmatmul.mubr.bf16.gmra.mrb[0].mxu0 %v831
      %v1027 = vpop.f32.mrb[0].mxu0
      %v1028 = vadd.f32 0.0, %v1027
      %v1029 = vpop.f32.mrb[0].mxu0
      %v1030 = vadd.f32 0.0, %v1029
      %v1031 = vpop.f32.mrb[0].mxu0
      %v1032 = vadd.f32 0.0, %v1031
      %v1033 = vpop.f32.mrb[0].mxu0
      %v1034 = vadd.f32 0.0, %v1033
      %1035 = vdwg.mxu0
      %1036 = vmatprep.subr.bf16.mxu0 0
      %1037 = vmatpush1.bf16.msra.mxu0 %v947
      %1038 = vmatprep.subr.bf16.mxu0 0
      %1039 = vmatpush1.bf16.msra.mxu0 %v950
      %1040 = vmatprep.subr.bf16.mxu0 0
      %1041 = vmatpush1.bf16.msra.mxu0 %v953
      %1042 = vmatprep.subr.bf16.mxu0 0
      %1043 = vmatpush1.bf16.msra.mxu0 %v956
      %1044 = vmatprep.subr.bf16.mxu0 0
      %1045 = vmatpush1.bf16.msra.mxu0 %v959
      %1046 = vmatprep.subr.bf16.mxu0 0
      %1047 = vmatpush1.bf16.msra.mxu0 %v962
      %1048 = vmatprep.subr.bf16.mxu0 0
      %1049 = vmatpush1.bf16.msra.mxu0 %v965
      %1050 = vmatprep.subr.bf16.mxu0 0
      %1051 = vmatpush1.bf16.msra.mxu0 %v968
      %1052 = vmatprep.subr.bf16.mxu0 0
      %1053 = vmatpush1.bf16.msra.mxu0 0
      %1054 = vmatprep.subr.bf16.mxu0 0
      %1055 = vmatpush1.bf16.msra.mxu0 0
      %1056 = vmatprep.subr.bf16.mxu0 0
      %1057 = vmatpush1.bf16.msra.mxu0 0
      %1058 = vmatprep.subr.bf16.mxu0 0
      %1059 = vmatpush1.bf16.msra.mxu0 0
      %1060 = vmatprep.subr.bf16.mxu0 0
      %1061 = vmatpush1.bf16.msra.mxu0 0
      %1062 = vmatprep.subr.bf16.mxu0 0
      %1063 = vmatpush1.bf16.msra.mxu0 0
      %1064 = vmatprep.subr.bf16.mxu0 0
      %1065 = vmatpush1.bf16.msra.mxu0 0
      %1066 = vmatprep.subr.bf16.mxu0 0
      %1067 = vmatpush1.bf16.msra.mxu0 0
      %1068 = vmatprep.mubr.bf16.mxu0 0
      %1069 = vmatmul.mubr.bf16.gmra.mrb[0].mxu0 %v831
      %v1070 = vpop.f32.mrb[0].mxu0
      %v1071 = vadd.f32 0.0, %v1070
      %v1072 = vpop.f32.mrb[0].mxu0
      %v1073 = vpop.f32.mrb[0].mxu0
      %v1074 = vadd.f32 0.0, %v1073
      %v1075 = vpop.f32.mrb[0].mxu0
      %1076 = vdwg.mxu0
      %v1077 = vadd.f32 %v825, %v1028
      %v1078 = vadd.f32 %v828, %v1032
      %v1079 = vxor.u32 %v1077, 2147483648
      %v1080 = vxor.u32 %v1078, 2147483648
      %v1081 = vmul.f32 %v1079, 1.442695
      %v1082 = vpow.pop %v1081
      %v1083 = vmul.f32 %v1080, 1.442695
      %v1084 = vpow.pop %v1083
      %v1085 = vadd.f32 %v1082, 1.0
      %v1086 = vadd.f32 %v1084, 1.0
      %v1087 = vrcp.pop %v1085
      %v1088 = vmul.f32 1.0, %v1087
      %v1089 = vrcp.pop %v1086
      %v1090 = vmul.f32 1.0, %v1089
      %v1091 = vadd.f32 %v826, %v1030
      %v1092 = vadd.f32 %v829, %v1034
      %v1093 = vxor.u32 %v1091, 2147483648
      %v1094 = vxor.u32 %v1092, 2147483648
      %v1095 = vmul.f32 %v1093, 1.442695
      %v1096 = vpow.pop %v1095
      %v1097 = vmul.f32 %v1094, 1.442695
      %v1098 = vpow.pop %v1097
      %v1099 = vadd.f32 %v1096, 1.0
      %v1100 = vadd.f32 %v1098, 1.0
      %v1101 = vrcp.pop %v1099
      %v1102 = vmul.f32 1.0, %v1101
      %v1103 = vrcp.pop %v1100
      %v1104 = vmul.f32 1.0, %v1103
      %v1106 = vlaneseq
      %v1107 = vshrl.u32 %v1106, 7
      %v1108 = vsub.s32 0, %v1107
      %v1109 = vrot.slane %v535, %v1108
      %v1111 = vadd.f32 %v1071, %v1109
      %v1112 = vadd.f32 %v1074, %v1109
      %v1113 = vmul.f32 %v1088, %v1111
      %v1114 = vmul.f32 %v1090, %v1112
      %v1115 = vadd.f32 %v827, %v1113
      %v1116 = vadd.f32 %v830, %v1114
      %v1117 = vtanh.pop %v1115
      %v1118 = vtanh.pop %v1116
      %v1119 = vsub.f32 %v820, %v1117
      %v1120 = vsub.f32 %v821, %v1118
      %v1121 = vmul.f32 %v1102, %v1119
      %v1122 = vmul.f32 %v1104, %v1120
      %v1123 = vadd.f32 %v1117, %v1121
      %v1124 = vadd.f32 %v1118, %v1122
    $region67: #{tpu_custom_call.1} parent=1 // loop_footer
      %s819 = sadd.s32 1, %s815
    $region68: #{tpu_custom_call.1} parent=1 // loop_footer_branch
      %814 = sbr.rel target = $region64
    $region69: #{tpu_custom_call.1} parent=1 // loop_exit
      _
    %v1125 = vpack.c.bf16 %v821, %v820
    %v1126 = vld [vmem:[%s6] sm:$0xf]
    %v1127 = vld [vmem:[%s6 + $0x4] sm:$0xf]
    %v1128 = vld [vmem:[%s6 + $0x8] sm:$0xf]
    %v1129 = vld [vmem:[%s6 + $0xc] sm:$0xf]
    %v1130 = vld [vmem:[%s6 + $0x10] sm:$0xf]
    %v1131 = vld [vmem:[%s6 + $0x14] sm:$0xf]
    %v1132 = vld [vmem:[%s6 + $0x18] sm:$0xf]
    %v1133 = vld [vmem:[%s6 + $0x1c] sm:$0xf]
    %v1134 = vld [vmem:[%s6 + $0x20] sm:$0xf]
    %v1135 = vld [vmem:[%s6 + $0x24] sm:$0xf]
    %v1136 = vld [vmem:[%s6 + $0x28] sm:$0xf]
    %v1137 = vld [vmem:[%s6 + $0x2c] sm:$0xf]
    %v1138 = vld [vmem:[%s6 + $0x30] sm:$0xf]
    %v1139 = vld [vmem:[%s6 + $0x34] sm:$0xf]
    %v1140 = vld [vmem:[%s6 + $0x38] sm:$0xf]
    %v1141 = vld [vmem:[%s6 + $0x3c] sm:$0xf]
    %v1142 = vld [vmem:[%s7] sm:$0x1]
    %v1144 = vlaneseq
    %v1145 = vshrl.u32 %v1144, 7
    %v1146 = vsub.s32 0, %v1145
    %v1147 = vrot.slane %v1142, %v1146
    %v1165 = vunpack.c.l.b16 %v1126
    %v1166 = vunpack.c.l.b16 %v1127
    %v1167 = vunpack.c.l.b16 %v1128
    %v1168 = vunpack.c.l.b16 %v1129
    %v1169 = vunpack.c.l.b16 %v1130
    %v1170 = vunpack.c.l.b16 %v1131
    %v1171 = vunpack.c.l.b16 %v1132
    %v1172 = vunpack.c.l.b16 %v1133
    %v1173 = vunpack.c.l.b16 %v1134
    %v1174 = vunpack.c.l.b16 %v1135
    %v1175 = vunpack.c.l.b16 %v1136
    %v1176 = vunpack.c.l.b16 %v1137
    %v1177 = vunpack.c.l.b16 %v1138
    %v1178 = vunpack.c.l.b16 %v1139
    %v1179 = vunpack.c.l.b16 %v1140
    %v1180 = vunpack.c.l.b16 %v1141
    %v1181 = vpack.c.b16 %v1166, %v1165
    %v1182 = vpack.c.b16 %v1168, %v1167
    %v1183 = vpack.c.b16 %v1170, %v1169
    %v1184 = vpack.c.b16 %v1172, %v1171
    %v1185 = vpack.c.b16 %v1174, %v1173
    %v1186 = vpack.c.b16 %v1176, %v1175
    %v1187 = vpack.c.b16 %v1178, %v1177
    %v1188 = vpack.c.b16 %v1180, %v1179
    %1197 = vmatprep.subr.bf16.mxu0 0
    %1198 = vmatpush1.bf16.msra.mxu0 %v1181
    %1199 = vmatprep.subr.bf16.mxu0 0
    %1200 = vmatpush1.bf16.msra.mxu0 %v1182
    %1201 = vmatprep.subr.bf16.mxu0 0
    %1202 = vmatpush1.bf16.msra.mxu0 %v1183
    %1203 = vmatprep.subr.bf16.mxu0 0
    %1204 = vmatpush1.bf16.msra.mxu0 %v1184
    %1205 = vmatprep.subr.bf16.mxu0 0
    %1206 = vmatpush1.bf16.msra.mxu0 %v1185
    %1207 = vmatprep.subr.bf16.mxu0 0
    %1208 = vmatpush1.bf16.msra.mxu0 %v1186
    %1209 = vmatprep.subr.bf16.mxu0 0
    %1210 = vmatpush1.bf16.msra.mxu0 %v1187
    %1211 = vmatprep.subr.bf16.mxu0 0
    %1212 = vmatpush1.bf16.msra.mxu0 %v1188
    %1213 = vmatprep.subr.bf16.mxu0 0
    %1214 = vmatpush1.bf16.msra.mxu0 0
    %1215 = vmatprep.subr.bf16.mxu0 0
    %1216 = vmatpush1.bf16.msra.mxu0 0
    %1217 = vmatprep.subr.bf16.mxu0 0
    %1218 = vmatpush1.bf16.msra.mxu0 0
    %1219 = vmatprep.subr.bf16.mxu0 0
    %1220 = vmatpush1.bf16.msra.mxu0 0
    %1221 = vmatprep.subr.bf16.mxu0 0
    %1222 = vmatpush1.bf16.msra.mxu0 0
    %1223 = vmatprep.subr.bf16.mxu0 0
    %1224 = vmatpush1.bf16.msra.mxu0 0
    %1225 = vmatprep.subr.bf16.mxu0 0
    %1226 = vmatpush1.bf16.msra.mxu0 0
    %1227 = vmatprep.subr.bf16.mxu0 0
    %1228 = vmatpush1.bf16.msra.mxu0 0
    %1229 = vmatprep.mubr.bf16.mxu0 0
    %1230 = vmatmul.mubr.bf16.gmra.mrb[0].mxu0 %v1125
    %v1231 = vpop.f32.mrb[0].mxu0
    %v1232 = vadd.f32 %v1147, %v1231
    %v1233 = vpop.f32.mrb[0].mxu0
    %v1234 = vpop.f32.mrb[0].mxu0
    %v1235 = vadd.f32 %v1147, %v1234
    %v1236 = vpop.f32.mrb[0].mxu0
    %1237 = vdwg.mxu0
    %1238 = vst [vmem:[#allocation9] sm:$0xff] %v1232
    %1239 = vst [vmem:[#allocation9 + $0x8] sm:$0xff] %v1235
    // Predicated region
    $region70: #{tpu_custom_call.1} parent=1 // pred_check
      _
    $region71: #{tpu_custom_call.1} parent=1 // pred_check_branch
      %1241 = sbr.rel (0) target = $region73
    $region72: #{tpu_custom_call.1} parent=1 // pred_region
      %s1243 = ssub.s32 256, 256
      %1244 = vsyncadd [#allocation6], %s1243
      %s1245 = sshll.u32 [#allocation9], 4
      %s1246 = int_to_ptr.vmem [resolvable:$true] %s1245
      %1251 = dma.vmem_to_hbm [thread:$0]  %s1246, 256, %s8, [#allocation6], 128, 128, 8
    $region73: #{tpu_custom_call.1} parent=1 // pred_fallthru
      _
    // Predicated region
    $region74: #{tpu_custom_call.1} parent=1 // pred_check
      _
    $region75: #{tpu_custom_call.1} parent=1 // pred_check_branch
      %1253 = sbr.rel (0) target = $region77
    $region76: #{tpu_custom_call.1} parent=1 // pred_region
      %1254 = dma.done [#allocation6], 256
    $region77: #{tpu_custom_call.1} parent=1 // pred_fallthru
      _
    %1255 = vsyncpa [#allocation5], 1
    %1256 = vsyncpa [#allocation8], 1
    %1257 = vsyncpa [#allocation6], 1

// kernel: tpu_custom_call.1
$region0: #{tpu_custom_call.1}
  #allocation0 [shape = 'u32[]', space=smem, size = 0x4, offset = 0x4, fixed_abs, tag = 'smem constant byte address 0x4 - core index']
  #allocation1 [shape = 'u32[144,128]{1,0:T(1,128)}', space=vmem, size = 0x12000, scoped, tag = 'internal scratch']
  #allocation2 [shape = 'bf16[8,16,128]{2,1,0:T(16,128)(2,1)}', space=vmem, size = 0x8000, scoped, tag = 'scratch operand']
  #allocation3 [shape = 'f32[8,16,384]{2,1,0:T(8,128)}', space=vmem, size = 0x30000, scoped, tag = 'scratch operand']
  %s0 = inlined_call_operand.vmem [shape: bf16[8,16,4], index: 0, kind: input, shape index: {}]
  %s1 = inlined_call_operand.vmem [shape: bf16[4,384], index: 1, kind: input, shape index: {}]
  %s2 = inlined_call_operand.hbm [shape: bf16[1,128,384], index: 2, kind: input, shape index: {}]
  %s3 = inlined_call_operand.hbm [shape: bf16[2,128,384], index: 3, kind: input, shape index: {}]
  %s4 = inlined_call_operand.vmem [shape: f32[2,1,384], index: 4, kind: input, shape index: {}]
  %s5 = inlined_call_operand.vmem [shape: f32[2,1,128], index: 5, kind: input, shape index: {}]
  %s6 = inlined_call_operand.vmem [shape: bf16[128,128], index: 6, kind: input, shape index: {}]
  %s7 = inlined_call_operand.vmem [shape: f32[1,128], index: 7, kind: input, shape index: {}]
  %s8 = inlined_call_operand.hbm [shape: f32[16,128], index: 8, kind: output, shape index: {}]
  %s9 = sld [smem:[#allocation0]]
  $region78: #{tpu_custom_call.1} parent=0
    _
  %s11 = ssub.s32 1, %s9
  %s12 = scalar_select 0, %s11, %s9
  $region1: #{tpu_custom_call.1} parent=0
    #allocation4 [shape = 'u8[98304]{0}', space=vmem, size = 0x18000, scoped, tag = 'input window, operand 2, single buffered']
    #allocation5 [shape = 's32[1]{0}', space=sflag, size = 0x4, scoped, tag = 'scoped memory for tpu_custom_call.1']
    #allocation6 [shape = 's32[1]{0}', space=sflag, size = 0x4, scoped, tag = 'scoped memory for tpu_custom_call.1']
    #allocation7 [shape = 'u8[196608]{0}', space=vmem, size = 0x30000, scoped, tag = 'input window, operand 3, single buffered']
    #allocation8 [shape = 's32[1]{0}', space=sflag, size = 0x4, scoped, tag = 'scoped memory for tpu_custom_call.1']
    #allocation9 [shape = 'u8[8192]{0}', space=vmem, size = 0x2000, scoped, tag = 'output window, operand 0, single buffered']
    %13 = vsyncpa [#allocation5], 0
    %14 = vsyncpa [#allocation8], 0
    %15 = vsyncpa [#allocation6], 0
    // Predicated region
    $region2: #{tpu_custom_call.1} parent=1 // pred_check
      _
    $region3: #{tpu_custom_call.1} parent=1 // pred_check_branch
      %17 = sbr.rel (0) target = $region5
    $region4: #{tpu_custom_call.1} parent=1 // pred_region
      _
    $region5: #{tpu_custom_call.1} parent=1 // pred_fallthru
      _
    // Predicated region
    $region6: #{tpu_custom_call.1} parent=1 // pred_check
      _
    $region7: #{tpu_custom_call.1} parent=1 // pred_check_branch
      %19 = sbr.rel (0) target = $region9
    $region8: #{tpu_custom_call.1} parent=1 // pred_region
      _
    $region9: #{tpu_custom_call.1} parent=1 // pred_fallthru
      _
    // Predicated region
    $region10: #{tpu_custom_call.1} parent=1 // pred_check
      _
    $region11: #{tpu_custom_call.1} parent=1 // pred_check_branch
      %21 = sbr.rel (0) target = $region13
    $region12: #{tpu_custom_call.1} parent=1 // pred_region
      %s23 = ssub.s32 3072, 3072
      %24 = vsyncadd [#allocation5], %s23
      %s25 = sshll.u32 [#allocation4], 4
      %s26 = int_to_ptr.vmem [resolvable:$true] %s25
      %31 = dma.hbm_to_vmem [thread:$0]  %s2, 3072, %s26, [#allocation5], 192, 192, 12
    $region13: #{tpu_custom_call.1} parent=1 // pred_fallthru
      _
    // Predicated region
    $region14: #{tpu_custom_call.1} parent=1 // pred_check
      _
    $region15: #{tpu_custom_call.1} parent=1 // pred_check_branch
      %33 = sbr.rel (0) target = $region17
    $region16: #{tpu_custom_call.1} parent=1 // pred_region
      %s35 = ssub.s32 6144, 6144
      %36 = vsyncadd [#allocation8], %s35
      %s37 = sshll.u32 [#allocation7], 4
      %s38 = int_to_ptr.vmem [resolvable:$true] %s37
      %43 = dma.hbm_to_vmem [thread:$0]  %s3, 6144, %s38, [#allocation8], 192, 192, 12
    $region17: #{tpu_custom_call.1} parent=1 // pred_fallthru
      _
    // Predicated region
    $region18: #{tpu_custom_call.1} parent=1 // pred_check
      _
    $region19: #{tpu_custom_call.1} parent=1 // pred_check_branch
      %45 = sbr.rel (0) target = $region21
    $region20: #{tpu_custom_call.1} parent=1 // pred_region
      _
    $region21: #{tpu_custom_call.1} parent=1 // pred_fallthru
      _
    // Predicated region
    $region22: #{tpu_custom_call.1} parent=1 // pred_check
      _
    $region23: #{tpu_custom_call.1} parent=1 // pred_check_branch
      %47 = sbr.rel (0) target = $region25
    $region24: #{tpu_custom_call.1} parent=1 // pred_region
      _
    $region25: #{tpu_custom_call.1} parent=1 // pred_fallthru
      _
    // Predicated region
    $region26: #{tpu_custom_call.1} parent=1 // pred_check
      _
    $region27: #{tpu_custom_call.1} parent=1 // pred_check_branch
      %49 = sbr.rel (0) target = $region29
    $region28: #{tpu_custom_call.1} parent=1 // pred_region
      _
    $region29: #{tpu_custom_call.1} parent=1 // pred_fallthru
      _
    // Predicated region
    $region30: #{tpu_custom_call.1} parent=1 // pred_check
      _
    $region31: #{tpu_custom_call.1} parent=1 // pred_check_branch
      %51 = sbr.rel (0) target = $region33
    $region32: #{tpu_custom_call.1} parent=1 // pred_region
      _
    $region33: #{tpu_custom_call.1} parent=1 // pred_fallthru
      _
    // Predicated region
    $region34: #{tpu_custom_call.1} parent=1 // pred_check
      _
    $region35: #{tpu_custom_call.1} parent=1 // pred_check_branch
      %53 = sbr.rel (0) target = $region37
    $region36: #{tpu_custom_call.1} parent=1 // pred_region
      %54 = dma.done [#allocation5], 3072
    $region37: #{tpu_custom_call.1} parent=1 // pred_fallthru
      _
    // Predicated region
    $region38: #{tpu_custom_call.1} parent=1 // pred_check
      _
    $region39: #{tpu_custom_call.1} parent=1 // pred_check_branch
      %56 = sbr.rel (0) target = $region41
    $region40: #{tpu_custom_call.1} parent=1 // pred_region
      %57 = dma.done [#allocation8], 6144
    $region41: #{tpu_custom_call.1} parent=1 // pred_fallthru
      _
    %v59 = vld [vmem:[%s4] sm:$0x7]
    %v60 = vld [vmem:[%s5] sm:$0x1]
    loop: start=0, step=1, limit=8
    $region42: #{tpu_custom_call.1} parent=1 // loop_pre_header
      _
    $region43: #{tpu_custom_call.1} parent=1 // loop_header
      %s62 = sphi 0, %s66
      %p63 = scmp.ge.s32.totalorder %s62, 8
    $region44: #{tpu_custom_call.1} parent=1 // loop_header_branch
      %65 = sbr.rel (%p63) target = $region48
    $region45: #{tpu_custom_call.1} parent=1 // loop_body
      %s67 = smul.u32 %s62, 2
      %s68 = smul.addr %s67, 4
      %s69 = scalar_lea.vmem %s0, %s68
      %v70 = vld [vmem:[%s69] sm:$0xf]
      %v71 = vld [vmem:[%s69 + $0x4] sm:$0xf]
      %v72 = vld [vmem:[%s1] sm:$0x3f]
      %v74 = vlaneseq
      %v75 = vshrl.u32 %v74, 7
      %v76 = vsub.s32 0, %v75
      %v77 = vrot.slane %v59, %v76
      %v78 = vlaneseq
      %v79 = vshrl.u32 %v78, 7
      %v80 = vsub.s32 1, %v79
      %v81 = vrot.slane %v59, %v80
      %v82 = vlaneseq
      %v83 = vshrl.u32 %v82, 7
      %v84 = vsub.s32 2, %v83
      %v85 = vrot.slane %v59, %v84
      %v91 = vunpack.c.l.b16 %v70
      %v92 = vunpack.c.l.b16 %v71
      %v93 = vpack.c.b16 %v92, %v91
      %v95 = vcombine.high %v72, %v72
      %v97 = vunpack.c.l.s4 1983009808
      %v98 = vunpack.c.0.s8 %v97
      %v99 = vlaneseq
      %v100 = vshrl.u32 %v99, 7
      %v101 = vsub.s32 %v98, %v100
      %v102 = vrot.slane %v72, %v101
      %v104 = vunpack.c.l.s4 1983009808
      %v105 = vunpack.c.0.s8 %v104
      %v106 = vlaneseq
      %v107 = vshrl.u32 %v106, 7
      %v108 = vsub.s32 %v105, %v107
      %v109 = vrot.slane %v95, %v108
      %v110 = vcombine.high %v102, %v102
      %vm111 = vcmask 31744
      %v113 = vsel %vm111, %v93, 0
      %vm115 = vcmask 1041408
      %v117 = vsel %vm115, %v102, 0
      %v120 = vsel %vm115, %v110, 0
      %v123 = vsel %vm115, %v109, 0
      %125 = vmatprep.subr.bf16.mxu0 %v120
      %126 = vmatpush1.bf16.msra.mxu0 %v117
      %127 = vmatprep.subr.bf16.mxu0 0
      %128 = vmatpush1.bf16.msra.mxu0 0
      %129 = vmatprep.subr.bf16.mxu0 0
      %130 = vmatpush1.bf16.msra.mxu0 0
      %131 = vmatprep.subr.bf16.mxu0 0
      %132 = vmatpush1.bf16.msra.mxu0 0
      %133 = vmatprep.subr.bf16.mxu0 0
      %134 = vmatpush1.bf16.msra.mxu0 0
      %135 = vmatprep.subr.bf16.mxu0 0
      %136 = vmatpush1.bf16.msra.mxu0 0
      %137 = vmatprep.subr.bf16.mxu0 0
      %138 = vmatpush1.bf16.msra.mxu0 0
      %139 = vmatprep.subr.bf16.mxu0 0
      %140 = vmatpush1.bf16.msra.mxu0 0
      %141 = vmatprep.subr.bf16.mxu0 0
      %142 = vmatpush1.bf16.msra.mxu0 0
      %143 = vmatprep.subr.bf16.mxu0 0
      %144 = vmatpush1.bf16.msra.mxu0 0
      %145 = vmatprep.subr.bf16.mxu0 0
      %146 = vmatpush1.bf16.msra.mxu0 0
      %147 = vmatprep.subr.bf16.mxu0 0
      %148 = vmatpush1.bf16.msra.mxu0 0
      %149 = vmatprep.subr.bf16.mxu0 0
      %150 = vmatpush1.bf16.msra.mxu0 0
      %151 = vmatprep.subr.bf16.mxu0 0
      %152 = vmatpush1.bf16.msra.mxu0 0
      %153 = vmatprep.subr.bf16.mxu0 0
      %154 = vmatpush1.bf16.msra.mxu0 0
      %155 = vmatprep.subr.bf16.mxu0 0
      %156 = vmatpush1.bf16.msra.mxu0 0
      %157 = vmatprep.mubr.bf16.mxu0 0
      %158 = vmatmul.mubr.bf16.gmra.mrb[0].mxu0 %v113
      %v159 = vpop.f32.mrb[0].mxu0
      %v160 = vadd.f32 %v77, %v159
      %v161 = vpop.f32.mrb[0].mxu0
      %v162 = vadd.f32 %v81, %v161
      %v163 = vpop.f32.mrb[0].mxu0
      %v164 = vadd.f32 %v77, %v163
      %v165 = vpop.f32.mrb[0].mxu0
      %v166 = vadd.f32 %v81, %v165
      %167 = vdwg.mxu0
      %168 = vmatprep.subr.bf16.mxu0 0
      %169 = vmatpush1.bf16.msra.mxu0 %v123
      %170 = vmatprep.subr.bf16.mxu0 0
      %171 = vmatpush1.bf16.msra.mxu0 0
      %172 = vmatprep.subr.bf16.mxu0 0
      %173 = vmatpush1.bf16.msra.mxu0 0
      %174 = vmatprep.subr.bf16.mxu0 0
      %175 = vmatpush1.bf16.msra.mxu0 0
      %176 = vmatprep.subr.bf16.mxu0 0
      %177 = vmatpush1.bf16.msra.mxu0 0
      %178 = vmatprep.subr.bf16.mxu0 0
      %179 = vmatpush1.bf16.msra.mxu0 0
      %180 = vmatprep.subr.bf16.mxu0 0
      %181 = vmatpush1.bf16.msra.mxu0 0
      %182 = vmatprep.subr.bf16.mxu0 0
      %183 = vmatpush1.bf16.msra.mxu0 0
      %184 = vmatprep.subr.bf16.mxu0 0
      %185 = vmatpush1.bf16.msra.mxu0 0
      %186 = vmatprep.subr.bf16.mxu0 0
      %187 = vmatpush1.bf16.msra.mxu0 0
      %188 = vmatprep.subr.bf16.mxu0 0
      %189 = vmatpush1.bf16.msra.mxu0 0
      %190 = vmatprep.subr.bf16.mxu0 0
      %191 = vmatpush1.bf16.msra.mxu0 0
      %192 = vmatprep.subr.bf16.mxu0 0
      %193 = vmatpush1.bf16.msra.mxu0 0
      %194 = vmatprep.subr.bf16.mxu0 0
      %195 = vmatpush1.bf16.msra.mxu0 0
      %196 = vmatprep.subr.bf16.mxu0 0
      %197 = vmatpush1.bf16.msra.mxu0 0
      %198 = vmatprep.subr.bf16.mxu0 0
      %199 = vmatpush1.bf16.msra.mxu0 0
      %200 = vmatprep.mubr.bf16.mxu0 0
      %201 = vmatmul.mubr.bf16.gmra.mrb[0].mxu0 %v113
      %v202 = vpop.f32.mrb[0].mxu0
      %v203 = vadd.f32 %v85, %v202
      %v204 = vpop.f32.mrb[0].mxu0
      %v205 = vpop.f32.mrb[0].mxu0
      %v206 = vadd.f32 %v85, %v205
      %v207 = vpop.f32.mrb[0].mxu0
      %208 = vdwg.mxu0
      %s209 = smul.u32 %s62, 6
      %s210 = smul.addr %s209, 8
      %s211 = scalar_lea.vmem [#allocation3], %s210
      %212 = vst [vmem:[%s211] sm:$0xff] %v160
      %213 = vst [vmem:[%s211 + $0x8] sm:$0xff] %v162
      %214 = vst [vmem:[%s211 + $0x10] sm:$0xff] %v203
      %215 = vst [vmem:[%s211 + $0x18] sm:$0xff] %v164
      %216 = vst [vmem:[%s211 + $0x20] sm:$0xff] %v166
      %217 = vst [vmem:[%s211 + $0x28] sm:$0xff] %v206
    $region46: #{tpu_custom_call.1} parent=1 // loop_footer
      %s66 = sadd.s32 1, %s62
    $region47: #{tpu_custom_call.1} parent=1 // loop_footer_branch
      %61 = sbr.rel target = $region43
    $region48: #{tpu_custom_call.1} parent=1 // loop_exit
      _
    loop: start=0, step=1, limit=8
    $region49: #{tpu_custom_call.1} parent=1 // loop_pre_header
      _
    $region50: #{tpu_custom_call.1} parent=1 // loop_header
      %s219 = sphi 0, %s223
      %p220 = scmp.ge.s32.totalorder %s219, 8
      %v224 = vphi 0.0, %v526
      %v225 = vphi 0.0, %v527
    $region51: #{tpu_custom_call.1} parent=1 // loop_header_branch
      %222 = sbr.rel (%p220) target = $region55
    $region52: #{tpu_custom_call.1} parent=1 // loop_body
      %s226 = smul.u32 %s219, 6
      %s227 = smul.addr %s226, 8
      %s228 = scalar_lea.vmem [#allocation3], %s227
      %v229 = vld [vmem:[%s228] sm:$0xff]
      %v230 = vld [vmem:[%s228 + $0x8] sm:$0xff]
      %v231 = vld [vmem:[%s228 + $0x10] sm:$0xff]
      %v232 = vld [vmem:[%s228 + $0x18] sm:$0xff]
      %v233 = vld [vmem:[%s228 + $0x20] sm:$0xff]
      %v234 = vld [vmem:[%s228 + $0x28] sm:$0xff]
      %v235 = vpack.c.bf16 %v225, %v224
      %v236 = vld [vmem:[#allocation7] sm:$0xff]
      %v237 = vld [vmem:[#allocation7 + $0x8] sm:$0xf]
      %v238 = vld [vmem:[#allocation7 + $0xc] sm:$0xff]
      %v239 = vld [vmem:[#allocation7 + $0x14] sm:$0xf]
      %v240 = vld [vmem:[#allocation7 + $0x18] sm:$0xff]
      %v241 = vld [vmem:[#allocation7 + $0x20] sm:$0xf]
      %v242 = vld [vmem:[#allocation7 + $0x24] sm:$0xff]
      %v243 = vld [vmem:[#allocation7 + $0x2c] sm:$0xf]
      %v244 = vld [vmem:[#allocation7 + $0x30] sm:$0xff]
      %v245 = vld [vmem:[#allocation7 + $0x38] sm:$0xf]
      %v246 = vld [vmem:[#allocation7 + $0x3c] sm:$0xff]
      %v247 = vld [vmem:[#allocation7 + $0x44] sm:$0xf]
      %v248 = vld [vmem:[#allocation7 + $0x48] sm:$0xff]
      %v249 = vld [vmem:[#allocation7 + $0x50] sm:$0xf]
      %v250 = vld [vmem:[#allocation7 + $0x54] sm:$0xff]
      %v251 = vld [vmem:[#allocation7 + $0x5c] sm:$0xf]
      %v252 = vld [vmem:[#allocation7 + $0x60] sm:$0xff]
      %v253 = vld [vmem:[#allocation7 + $0x68] sm:$0xf]
      %v254 = vld [vmem:[#allocation7 + $0x6c] sm:$0xff]
      %v255 = vld [vmem:[#allocation7 + $0x74] sm:$0xf]
      %v256 = vld [vmem:[#allocation7 + $0x78] sm:$0xff]
      %v257 = vld [vmem:[#allocation7 + $0x80] sm:$0xf]
      %v258 = vld [vmem:[#allocation7 + $0x84] sm:$0xff]
      %v259 = vld [vmem:[#allocation7 + $0x8c] sm:$0xf]
      %v260 = vld [vmem:[#allocation7 + $0x90] sm:$0xff]
      %v261 = vld [vmem:[#allocation7 + $0x98] sm:$0xf]
      %v262 = vld [vmem:[#allocation7 + $0x9c] sm:$0xff]
      %v263 = vld [vmem:[#allocation7 + $0xa4] sm:$0xf]
      %v264 = vld [vmem:[#allocation7 + $0xa8] sm:$0xff]
      %v265 = vld [vmem:[#allocation7 + $0xb0] sm:$0xf]
      %v266 = vld [vmem:[#allocation7 + $0xb4] sm:$0xff]
      %v267 = vld [vmem:[#allocation7 + $0xbc] sm:$0xf]
      %v300 = vunpack.c.l.b16 %v236
      %v301 = vunpack.c.h.b16 %v236
      %v302 = vunpack.c.l.b16 %v237
      %v303 = vunpack.c.l.b16 %v238
      %v304 = vunpack.c.h.b16 %v238
      %v305 = vunpack.c.l.b16 %v239
      %v306 = vunpack.c.l.b16 %v240
      %v307 = vunpack.c.h.b16 %v240
      %v308 = vunpack.c.l.b16 %v241
      %v309 = vunpack.c.l.b16 %v242
      %v310 = vunpack.c.h.b16 %v242
      %v311 = vunpack.c.l.b16 %v243
      %v312 = vunpack.c.l.b16 %v244
      %v313 = vunpack.c.h.b16 %v244
      %v314 = vunpack.c.l.b16 %v245
      %v315 = vunpack.c.l.b16 %v246
      %v316 = vunpack.c.h.b16 %v246
      %v317 = vunpack.c.l.b16 %v247
      %v318 = vunpack.c.l.b16 %v248
      %v319 = vunpack.c.h.b16 %v248
      %v320 = vunpack.c.l.b16 %v249
      %v321 = vunpack.c.l.b16 %v250
      %v322 = vunpack.c.h.b16 %v250
      %v323 = vunpack.c.l.b16 %v251
      %v324 = vunpack.c.l.b16 %v252
      %v325 = vunpack.c.h.b16 %v252
      %v326 = vunpack.c.l.b16 %v253
      %v327 = vunpack.c.l.b16 %v254
      %v328 = vunpack.c.h.b16 %v254
      %v329 = vunpack.c.l.b16 %v255
      %v330 = vunpack.c.l.b16 %v256
      %v331 = vunpack.c.h.b16 %v256
      %v332 = vunpack.c.l.b16 %v257
      %v333 = vunpack.c.l.b16 %v258
      %v334 = vunpack.c.h.b16 %v258
      %v335 = vunpack.c.l.b16 %v259
      %v336 = vunpack.c.l.b16 %v260
      %v337 = vunpack.c.h.b16 %v260
      %v338 = vunpack.c.l.b16 %v261
      %v339 = vunpack.c.l.b16 %v262
      %v340 = vunpack.c.h.b16 %v262
      %v341 = vunpack.c.l.b16 %v263
      %v342 = vunpack.c.l.b16 %v264
      %v343 = vunpack.c.h.b16 %v264
      %v344 = vunpack.c.l.b16 %v265
      %v345 = vunpack.c.l.b16 %v266
      %v346 = vunpack.c.h.b16 %v266
      %v347 = vunpack.c.l.b16 %v267
      %v348 = vpack.c.b16 %v303, %v300
      %v349 = vpack.c.b16 %v304, %v301
      %v350 = vpack.c.b16 %v305, %v302
      %v351 = vpack.c.b16 %v309, %v306
      %v352 = vpack.c.b16 %v310, %v307
      %v353 = vpack.c.b16 %v311, %v308
      %v354 = vpack.c.b16 %v315, %v312
      %v355 = vpack.c.b16 %v316, %v313
      %v356 = vpack.c.b16 %v317, %v314
      %v357 = vpack.c.b16 %v321, %v318
      %v358 = vpack.c.b16 %v322, %v319
      %v359 = vpack.c.b16 %v323, %v320
      %v360 = vpack.c.b16 %v327, %v324
      %v361 = vpack.c.b16 %v328, %v325
      %v362 = vpack.c.b16 %v329, %v326
      %v363 = vpack.c.b16 %v333, %v330
      %v364 = vpack.c.b16 %v334, %v331
      %v365 = vpack.c.b16 %v335, %v332
      %v366 = vpack.c.b16 %v339, %v336
      %v367 = vpack.c.b16 %v340, %v337
      %v368 = vpack.c.b16 %v341, %v338
      %v369 = vpack.c.b16 %v345, %v342
      %v370 = vpack.c.b16 %v346, %v343
      %v371 = vpack.c.b16 %v347, %v344
      %396 = vmatprep.subr.bf16.mxu0 %v349
      %397 = vmatpush1.bf16.msra.mxu0 %v348
      %398 = vmatprep.subr.bf16.mxu0 %v352
      %399 = vmatpush1.bf16.msra.mxu0 %v351
      %400 = vmatprep.subr.bf16.mxu0 %v355
      %401 = vmatpush1.bf16.msra.mxu0 %v354
      %402 = vmatprep.subr.bf16.mxu0 %v358
      %403 = vmatpush1.bf16.msra.mxu0 %v357
      %404 = vmatprep.subr.bf16.mxu0 %v361
      %405 = vmatpush1.bf16.msra.mxu0 %v360
      %406 = vmatprep.subr.bf16.mxu0 %v364
      %407 = vmatpush1.bf16.msra.mxu0 %v363
      %408 = vmatprep.subr.bf16.mxu0 %v367
      %409 = vmatpush1.bf16.msra.mxu0 %v366
      %410 = vmatprep.subr.bf16.mxu0 %v370
      %411 = vmatpush1.bf16.msra.mxu0 %v369
      %412 = vmatprep.subr.bf16.mxu0 0
      %413 = vmatpush1.bf16.msra.mxu0 0
      %414 = vmatprep.subr.bf16.mxu0 0
      %415 = vmatpush1.bf16.msra.mxu0 0
      %416 = vmatprep.subr.bf16.mxu0 0
      %417 = vmatpush1.bf16.msra.mxu0 0
      %418 = vmatprep.subr.bf16.mxu0 0
      %419 = vmatpush1.bf16.msra.mxu0 0
      %420 = vmatprep.subr.bf16.mxu0 0
      %421 = vmatpush1.bf16.msra.mxu0 0
      %422 = vmatprep.subr.bf16.mxu0 0
      %423 = vmatpush1.bf16.msra.mxu0 0
      %424 = vmatprep.subr.bf16.mxu0 0
      %425 = vmatpush1.bf16.msra.mxu0 0
      %426 = vmatprep.subr.bf16.mxu0 0
      %427 = vmatpush1.bf16.msra.mxu0 0
      %428 = vmatprep.mubr.bf16.mxu0 0
      %429 = vmatmul.mubr.bf16.gmra.mrb[0].mxu0 %v235
      %v430 = vpop.f32.mrb[0].mxu0
      %v431 = vadd.f32 0.0, %v430
      %v432 = vpop.f32.mrb[0].mxu0
      %v433 = vadd.f32 0.0, %v432
      %v434 = vpop.f32.mrb[0].mxu0
      %v435 = vadd.f32 0.0, %v434
      %v436 = vpop.f32.mrb[0].mxu0
      %v437 = vadd.f32 0.0, %v436
      %438 = vdwg.mxu0
      %439 = vmatprep.subr.bf16.mxu0 0
      %440 = vmatpush1.bf16.msra.mxu0 %v350
      %441 = vmatprep.subr.bf16.mxu0 0
      %442 = vmatpush1.bf16.msra.mxu0 %v353
      %443 = vmatprep.subr.bf16.mxu0 0
      %444 = vmatpush1.bf16.msra.mxu0 %v356
      %445 = vmatprep.subr.bf16.mxu0 0
      %446 = vmatpush1.bf16.msra.mxu0 %v359
      %447 = vmatprep.subr.bf16.mxu0 0
      %448 = vmatpush1.bf16.msra.mxu0 %v362
      %449 = vmatprep.subr.bf16.mxu0 0
      %450 = vmatpush1.bf16.msra.mxu0 %v365
      %451 = vmatprep.subr.bf16.mxu0 0
      %452 = vmatpush1.bf16.msra.mxu0 %v368
      %453 = vmatprep.subr.bf16.mxu0 0
      %454 = vmatpush1.bf16.msra.mxu0 %v371
      %455 = vmatprep.subr.bf16.mxu0 0
      %456 = vmatpush1.bf16.msra.mxu0 0
      %457 = vmatprep.subr.bf16.mxu0 0
      %458 = vmatpush1.bf16.msra.mxu0 0
      %459 = vmatprep.subr.bf16.mxu0 0
      %460 = vmatpush1.bf16.msra.mxu0 0
      %461 = vmatprep.subr.bf16.mxu0 0
      %462 = vmatpush1.bf16.msra.mxu0 0
      %463 = vmatprep.subr.bf16.mxu0 0
      %464 = vmatpush1.bf16.msra.mxu0 0
      %465 = vmatprep.subr.bf16.mxu0 0
      %466 = vmatpush1.bf16.msra.mxu0 0
      %467 = vmatprep.subr.bf16.mxu0 0
      %468 = vmatpush1.bf16.msra.mxu0 0
      %469 = vmatprep.subr.bf16.mxu0 0
      %470 = vmatpush1.bf16.msra.mxu0 0
      %471 = vmatprep.mubr.bf16.mxu0 0
      %472 = vmatmul.mubr.bf16.gmra.mrb[0].mxu0 %v235
      %v473 = vpop.f32.mrb[0].mxu0
      %v474 = vadd.f32 0.0, %v473
      %v475 = vpop.f32.mrb[0].mxu0
      %v476 = vpop.f32.mrb[0].mxu0
      %v477 = vadd.f32 0.0, %v476
      %v478 = vpop.f32.mrb[0].mxu0
      %479 = vdwg.mxu0
      %v480 = vadd.f32 %v229, %v431
      %v481 = vadd.f32 %v232, %v435
      %v482 = vxor.u32 %v480, 2147483648
      %v483 = vxor.u32 %v481, 2147483648
      %v484 = vmul.f32 %v482, 1.442695
      %v485 = vpow.pop %v484
      %v486 = vmul.f32 %v483, 1.442695
      %v487 = vpow.pop %v486
      %v488 = vadd.f32 %v485, 1.0
      %v489 = vadd.f32 %v487, 1.0
      %v490 = vrcp.pop %v488
      %v491 = vmul.f32 1.0, %v490
      %v492 = vrcp.pop %v489
      %v493 = vmul.f32 1.0, %v492
      %v494 = vadd.f32 %v230, %v433
      %v495 = vadd.f32 %v233, %v437
      %v496 = vxor.u32 %v494, 2147483648
      %v497 = vxor.u32 %v495, 2147483648
      %v498 = vmul.f32 %v496, 1.442695
      %v499 = vpow.pop %v498
      %v500 = vmul.f32 %v497, 1.442695
      %v501 = vpow.pop %v500
      %v502 = vadd.f32 %v499, 1.0
      %v503 = vadd.f32 %v501, 1.0
      %v504 = vrcp.pop %v502
      %v505 = vmul.f32 1.0, %v504
      %v506 = vrcp.pop %v503
      %v507 = vmul.f32 1.0, %v506
      %v509 = vlaneseq
      %v510 = vshrl.u32 %v509, 7
      %v511 = vsub.s32 0, %v510
      %v512 = vrot.slane %v60, %v511
      %v514 = vadd.f32 %v474, %v512
      %v515 = vadd.f32 %v477, %v512
      %v516 = vmul.f32 %v491, %v514
      %v517 = vmul.f32 %v493, %v515
      %v518 = vadd.f32 %v231, %v516
      %v519 = vadd.f32 %v234, %v517
      %v520 = vtanh.pop %v518
      %v521 = vtanh.pop %v519
      %v522 = vsub.f32 %v224, %v520
      %v523 = vsub.f32 %v225, %v521
      %v524 = vmul.f32 %v505, %v522
      %v525 = vmul.f32 %v507, %v523
      %v526 = vadd.f32 %v520, %v524
      %v527 = vadd.f32 %v521, %v525
      %v528 = vpack.c.bf16 %v527, %v526
      %s529 = smul.addr %s219, 8
      %s530 = scalar_lea.vmem [#allocation2], %s529
      %531 = vst [vmem:[%s530] sm:$0xff] %v528
    $region53: #{tpu_custom_call.1} parent=1 // loop_footer
      %s223 = sadd.s32 1, %s219
    $region54: #{tpu_custom_call.1} parent=1 // loop_footer_branch
      %218 = sbr.rel target = $region50
    $region55: #{tpu_custom_call.1} parent=1 // loop_exit
      _
    %s532 = scalar_lea.vmem %s4, 3
    %v533 = vld [vmem:[%s532] sm:$0x7]
    %s534 = scalar_lea.vmem %s5, 1
    %v535 = vld [vmem:[%s534] sm:$0x1]
    loop: start=0, step=1, limit=8
    $region56: #{tpu_custom_call.1} parent=1 // loop_pre_header
      _
    $region57: #{tpu_custom_call.1} parent=1 // loop_header
      %s537 = sphi 0, %s541
      %p538 = scmp.ge.s32.totalorder %s537, 8
    $region58: #{tpu_custom_call.1} parent=1 // loop_header_branch
      %540 = sbr.rel (%p538) target = $region62
    $region59: #{tpu_custom_call.1} parent=1 // loop_body
      %s542 = smul.addr %s537, 8
      %s543 = scalar_lea.vmem [#allocation2], %s542
      %v544 = vld [vmem:[%s543] sm:$0xff]
      %v545 = vld [vmem:[#allocation4] sm:$0xff]
      %v546 = vld [vmem:[#allocation4 + $0x8] sm:$0xf]
      %v547 = vld [vmem:[#allocation4 + $0xc] sm:$0xff]
      %v548 = vld [vmem:[#allocation4 + $0x14] sm:$0xf]
      %v549 = vld [vmem:[#allocation4 + $0x18] sm:$0xff]
      %v550 = vld [vmem:[#allocation4 + $0x20] sm:$0xf]
      %v551 = vld [vmem:[#allocation4 + $0x24] sm:$0xff]
      %v552 = vld [vmem:[#allocation4 + $0x2c] sm:$0xf]
      %v553 = vld [vmem:[#allocation4 + $0x30] sm:$0xff]
      %v554 = vld [vmem:[#allocation4 + $0x38] sm:$0xf]
      %v555 = vld [vmem:[#allocation4 + $0x3c] sm:$0xff]
      %v556 = vld [vmem:[#allocation4 + $0x44] sm:$0xf]
      %v557 = vld [vmem:[#allocation4 + $0x48] sm:$0xff]
      %v558 = vld [vmem:[#allocation4 + $0x50] sm:$0xf]
      %v559 = vld [vmem:[#allocation4 + $0x54] sm:$0xff]
      %v560 = vld [vmem:[#allocation4 + $0x5c] sm:$0xf]
      %v561 = vld [vmem:[#allocation4 + $0x60] sm:$0xff]
      %v562 = vld [vmem:[#allocation4 + $0x68] sm:$0xf]
      %v563 = vld [vmem:[#allocation4 + $0x6c] sm:$0xff]
      %v564 = vld [vmem:[#allocation4 + $0x74] sm:$0xf]
      %v565 = vld [vmem:[#allocation4 + $0x78] sm:$0xff]
      %v566 = vld [vmem:[#allocation4 + $0x80] sm:$0xf]
      %v567 = vld [vmem:[#allocation4 + $0x84] sm:$0xff]
      %v568 = vld [vmem:[#allocation4 + $0x8c] sm:$0xf]
      %v569 = vld [vmem:[#allocation4 + $0x90] sm:$0xff]
      %v570 = vld [vmem:[#allocation4 + $0x98] sm:$0xf]
      %v571 = vld [vmem:[#allocation4 + $0x9c] sm:$0xff]
      %v572 = vld [vmem:[#allocation4 + $0xa4] sm:$0xf]
      %v573 = vld [vmem:[#allocation4 + $0xa8] sm:$0xff]
      %v574 = vld [vmem:[#allocation4 + $0xb0] sm:$0xf]
      %v575 = vld [vmem:[#allocation4 + $0xb4] sm:$0xff]
      %v576 = vld [vmem:[#allocation4 + $0xbc] sm:$0xf]
      %v578 = vlaneseq
      %v579 = vshrl.u32 %v578, 7
      %v580 = vsub.s32 0, %v579
      %v581 = vrot.slane %v533, %v580
      %v582 = vlaneseq
      %v583 = vshrl.u32 %v582, 7
      %v584 = vsub.s32 1, %v583
      %v585 = vrot.slane %v533, %v584
      %v586 = vlaneseq
      %v587 = vshrl.u32 %v586, 7
      %v588 = vsub.s32 2, %v587
      %v589 = vrot.slane %v533, %v588
      %v625 = vunpack.c.l.b16 %v545
      %v626 = vunpack.c.h.b16 %v545
      %v627 = vunpack.c.l.b16 %v546
      %v628 = vunpack.c.l.b16 %v547
      %v629 = vunpack.c.h.b16 %v547
      %v630 = vunpack.c.l.b16 %v548
      %v631 = vunpack.c.l.b16 %v549
      %v632 = vunpack.c.h.b16 %v549
      %v633 = vunpack.c.l.b16 %v550
      %v634 = vunpack.c.l.b16 %v551
      %v635 = vunpack.c.h.b16 %v551
      %v636 = vunpack.c.l.b16 %v552
      %v637 = vunpack.c.l.b16 %v553
      %v638 = vunpack.c.h.b16 %v553
      %v639 = vunpack.c.l.b16 %v554
      %v640 = vunpack.c.l.b16 %v555
      %v641 = vunpack.c.h.b16 %v555
      %v642 = vunpack.c.l.b16 %v556
      %v643 = vunpack.c.l.b16 %v557
      %v644 = vunpack.c.h.b16 %v557
      %v645 = vunpack.c.l.b16 %v558
      %v646 = vunpack.c.l.b16 %v559
      %v647 = vunpack.c.h.b16 %v559
      %v648 = vunpack.c.l.b16 %v560
      %v649 = vunpack.c.l.b16 %v561
      %v650 = vunpack.c.h.b16 %v561
      %v651 = vunpack.c.l.b16 %v562
      %v652 = vunpack.c.l.b16 %v563
      %v653 = vunpack.c.h.b16 %v563
      %v654 = vunpack.c.l.b16 %v564
      %v655 = vunpack.c.l.b16 %v565
      %v656 = vunpack.c.h.b16 %v565
      %v657 = vunpack.c.l.b16 %v566
      %v658 = vunpack.c.l.b16 %v567
      %v659 = vunpack.c.h.b16 %v567
      %v660 = vunpack.c.l.b16 %v568
      %v661 = vunpack.c.l.b16 %v569
      %v662 = vunpack.c.h.b16 %v569
      %v663 = vunpack.c.l.b16 %v570
      %v664 = vunpack.c.l.b16 %v571
      %v665 = vunpack.c.h.b16 %v571
      %v666 = vunpack.c.l.b16 %v572
      %v667 = vunpack.c.l.b16 %v573
      %v668 = vunpack.c.h.b16 %v573
      %v669 = vunpack.c.l.b16 %v574
      %v670 = vunpack.c.l.b16 %v575
      %v671 = vunpack.c.h.b16 %v575
      %v672 = vunpack.c.l.b16 %v576
      %v673 = vpack.c.b16 %v628, %v625
      %v674 = vpack.c.b16 %v629, %v626
      %v675 = vpack.c.b16 %v630, %v627
      %v676 = vpack.c.b16 %v634, %v631
      %v677 = vpack.c.b16 %v635, %v632
      %v678 = vpack.c.b16 %v636, %v633
      %v679 = vpack.c.b16 %v640, %v637
      %v680 = vpack.c.b16 %v641, %v638
      %v681 = vpack.c.b16 %v642, %v639
      %v682 = vpack.c.b16 %v646, %v643
      %v683 = vpack.c.b16 %v647, %v644
      %v684 = vpack.c.b16 %v648, %v645
      %v685 = vpack.c.b16 %v652, %v649
      %v686 = vpack.c.b16 %v653, %v650
      %v687 = vpack.c.b16 %v654, %v651
      %v688 = vpack.c.b16 %v658, %v655
      %v689 = vpack.c.b16 %v659, %v656
      %v690 = vpack.c.b16 %v660, %v657
      %v691 = vpack.c.b16 %v664, %v661
      %v692 = vpack.c.b16 %v665, %v662
      %v693 = vpack.c.b16 %v666, %v663
      %v694 = vpack.c.b16 %v670, %v667
      %v695 = vpack.c.b16 %v671, %v668
      %v696 = vpack.c.b16 %v672, %v669
      %721 = vmatprep.subr.bf16.mxu0 %v674
      %722 = vmatpush1.bf16.msra.mxu0 %v673
      %723 = vmatprep.subr.bf16.mxu0 %v677
      %724 = vmatpush1.bf16.msra.mxu0 %v676
      %725 = vmatprep.subr.bf16.mxu0 %v680
      %726 = vmatpush1.bf16.msra.mxu0 %v679
      %727 = vmatprep.subr.bf16.mxu0 %v683
      %728 = vmatpush1.bf16.msra.mxu0 %v682
      %729 = vmatprep.subr.bf16.mxu0 %v686
      %730 = vmatpush1.bf16.msra.mxu0 %v685
      %731 = vmatprep.subr.bf16.mxu0 %v689
      %732 = vmatpush1.bf16.msra.mxu0 %v688
      %733 = vmatprep.subr.bf16.mxu0 %v692
      %734 = vmatpush1.bf16.msra.mxu0 %v691
      %735 = vmatprep.subr.bf16.mxu0 %v695
      %736 = vmatpush1.bf16.msra.mxu0 %v694
      %737 = vmatprep.subr.bf16.mxu0 0
      %738 = vmatpush1.bf16.msra.mxu0 0
      %739 = vmatprep.subr.bf16.mxu0 0
      %740 = vmatpush1.bf16.msra.mxu0 0
      %741 = vmatprep.subr.bf16.mxu0 0
      %742 = vmatpush1.bf16.msra.mxu0 0
      %743 = vmatprep.subr.bf16.mxu0 0
      %744 = vmatpush1.bf16.msra.mxu0 0
      %745 = vmatprep.subr.bf16.mxu0 0
      %746 = vmatpush1.bf16.msra.mxu0 0
      %747 = vmatprep.subr.bf16.mxu0 0
      %748 = vmatpush1.bf16.msra.mxu0 0
      %749 = vmatprep.subr.bf16.mxu0 0
      %750 = vmatpush1.bf16.msra.mxu0 0
      %751 = vmatprep.subr.bf16.mxu0 0
      %752 = vmatpush1.bf16.msra.mxu0 0
      %753 = vmatprep.mubr.bf16.mxu0 0
      %754 = vmatmul.mubr.bf16.gmra.mrb[0].mxu0 %v544
      %v755 = vpop.f32.mrb[0].mxu0
      %v756 = vadd.f32 %v581, %v755
      %v757 = vpop.f32.mrb[0].mxu0
      %v758 = vadd.f32 %v585, %v757
      %v759 = vpop.f32.mrb[0].mxu0
      %v760 = vadd.f32 %v581, %v759
      %v761 = vpop.f32.mrb[0].mxu0
      %v762 = vadd.f32 %v585, %v761
      %763 = vdwg.mxu0
      %764 = vmatprep.subr.bf16.mxu0 0
      %765 = vmatpush1.bf16.msra.mxu0 %v675
      %766 = vmatprep.subr.bf16.mxu0 0
      %767 = vmatpush1.bf16.msra.mxu0 %v678
      %768 = vmatprep.subr.bf16.mxu0 0
      %769 = vmatpush1.bf16.msra.mxu0 %v681
      %770 = vmatprep.subr.bf16.mxu0 0
      %771 = vmatpush1.bf16.msra.mxu0 %v684
      %772 = vmatprep.subr.bf16.mxu0 0
      %773 = vmatpush1.bf16.msra.mxu0 %v687
      %774 = vmatprep.subr.bf16.mxu0 0
      %775 = vmatpush1.bf16.msra.mxu0 %v690
      %776 = vmatprep.subr.bf16.mxu0 0
      %777 = vmatpush1.bf16.msra.mxu0 %v693
      %778 = vmatprep.subr.bf16.mxu0 0
      %779 = vmatpush1.bf16.msra.mxu0 %v696
      %780 = vmatprep.subr.bf16.mxu0 0
      %781 = vmatpush1.bf16.msra.mxu0 0
      %782 = vmatprep.subr.bf16.mxu0 0
      %783 = vmatpush1.bf16.msra.mxu0 0
      %784 = vmatprep.subr.bf16.mxu0 0
      %785 = vmatpush1.bf16.msra.mxu0 0
      %786 = vmatprep.subr.bf16.mxu0 0
      %787 = vmatpush1.bf16.msra.mxu0 0
      %788 = vmatprep.subr.bf16.mxu0 0
      %789 = vmatpush1.bf16.msra.mxu0 0
      %790 = vmatprep.subr.bf16.mxu0 0
      %791 = vmatpush1.bf16.msra.mxu0 0
      %792 = vmatprep.subr.bf16.mxu0 0
      %793 = vmatpush1.bf16.msra.mxu0 0
      %794 = vmatprep.subr.bf16.mxu0 0
      %795 = vmatpush1.bf16.msra.mxu0 0
      %796 = vmatprep.mubr.bf16.mxu0 0
      %797 = vmatmul.mubr.bf16.gmra.mrb[0].mxu0 %v544
      %v798 = vpop.f32.mrb[0].mxu0
      %v799 = vadd.f32 %v589, %v798
      %v800 = vpop.f32.mrb[0].mxu0
      %v801 = vpop.f32.mrb[0].mxu0
      %v802 = vadd.f32 %v589, %v801
      %v803 = vpop.f32.mrb[0].mxu0
      %804 = vdwg.mxu0
      %s805 = smul.u32 %s537, 6
      %s806 = smul.addr %s805, 8
      %s807 = scalar_lea.vmem [#allocation3], %s806
      %808 = vst [vmem:[%s807] sm:$0xff] %v756
      %809 = vst [vmem:[%s807 + $0x8] sm:$0xff] %v758
      %810 = vst [vmem:[%s807 + $0x10] sm:$0xff] %v799
      %811 = vst [vmem:[%s807 + $0x18] sm:$0xff] %v760
      %812 = vst [vmem:[%s807 + $0x20] sm:$0xff] %v762
      %813 = vst [vmem:[%s807 + $0x28] sm:$0xff] %v802
    $region60: #{tpu_custom_call.1} parent=1 // loop_footer
      %s541 = sadd.s32 1, %s537
    $region61: #{tpu_custom_call.1} parent=1 // loop_footer_branch
      %536 = sbr.rel target = $region57
    $region62: #{tpu_custom_call.1} parent=1 // loop_exit
      _
    loop: start=0, step=1, limit=8
    $region63: #{tpu_custom_call.1} parent=1 // loop_pre_header
      _
    $region64: #{tpu_custom_call.1} parent=1 // loop_header
      %s815 = sphi 0, %s819
      %p816 = scmp.ge.s32.totalorder %s815, 8
      %v820 = vphi 0.0, %v1123
      %v821 = vphi 0.0, %v1124
    $region65: #{tpu_custom_call.1} parent=1 // loop_header_branch
      %818 = sbr.rel (%p816) target = $region69
    $region66: #{tpu_custom_call.1} parent=1 // loop_body
      %s822 = smul.u32 %s815, 6
      %s823 = smul.addr %s822, 8
      %s824 = scalar_lea.vmem [#allocation3], %s823
      %v825 = vld [vmem:[%s824] sm:$0xff]
      %v826 = vld [vmem:[%s824 + $0x8] sm:$0xff]
      %v827 = vld [vmem:[%s824 + $0x10] sm:$0xff]
      %v828 = vld [vmem:[%s824 + $0x18] sm:$0xff]
      %v829 = vld [vmem:[%s824 + $0x20] sm:$0xff]
      %v830 = vld [vmem:[%s824 + $0x28] sm:$0xff]
      %v831 = vpack.c.bf16 %v821, %v820
      %s832 = scalar_lea.vmem [#allocation7], 192
      %v833 = vld [vmem:[%s832] sm:$0xff]
      %v834 = vld [vmem:[%s832 + $0x8] sm:$0xf]
      %v835 = vld [vmem:[%s832 + $0xc] sm:$0xff]
      %v836 = vld [vmem:[%s832 + $0x14] sm:$0xf]
      %v837 = vld [vmem:[%s832 + $0x18] sm:$0xff]
      %v838 = vld [vmem:[%s832 + $0x20] sm:$0xf]
      %v839 = vld [vmem:[%s832 + $0x24] sm:$0xff]
      %v840 = vld [vmem:[%s832 + $0x2c] sm:$0xf]
      %v841 = vld [vmem:[%s832 + $0x30] sm:$0xff]
      %v842 = vld [vmem:[%s832 + $0x38] sm:$0xf]
      %v843 = vld [vmem:[%s832 + $0x3c] sm:$0xff]
      %v844 = vld [vmem:[%s832 + $0x44] sm:$0xf]
      %v845 = vld [vmem:[%s832 + $0x48] sm:$0xff]
      %v846 = vld [vmem:[%s832 + $0x50] sm:$0xf]
      %v847 = vld [vmem:[%s832 + $0x54] sm:$0xff]
      %v848 = vld [vmem:[%s832 + $0x5c] sm:$0xf]
      %v849 = vld [vmem:[%s832 + $0x60] sm:$0xff]
      %v850 = vld [vmem:[%s832 + $0x68] sm:$0xf]
      %v851 = vld [vmem:[%s832 + $0x6c] sm:$0xff]
      %v852 = vld [vmem:[%s832 + $0x74] sm:$0xf]
      %v853 = vld [vmem:[%s832 + $0x78] sm:$0xff]
      %v854 = vld [vmem:[%s832 + $0x80] sm:$0xf]
      %v855 = vld [vmem:[%s832 + $0x84] sm:$0xff]
      %v856 = vld [vmem:[%s832 + $0x8c] sm:$0xf]
      %v857 = vld [vmem:[%s832 + $0x90] sm:$0xff]
      %v858 = vld [vmem:[%s832 + $0x98] sm:$0xf]
      %v859 = vld [vmem:[%s832 + $0x9c] sm:$0xff]
      %v860 = vld [vmem:[%s832 + $0xa4] sm:$0xf]
      %v861 = vld [vmem:[%s832 + $0xa8] sm:$0xff]
      %v862 = vld [vmem:[%s832 + $0xb0] sm:$0xf]
      %v863 = vld [vmem:[%s832 + $0xb4] sm:$0xff]
      %v864 = vld [vmem:[%s832 + $0xbc] sm:$0xf]
      %v897 = vunpack.c.l.b16 %v833
      %v898 = vunpack.c.h.b16 %v833
      %v899 = vunpack.c.l.b16 %v834
      %v900 = vunpack.c.l.b16 %v835
      %v901 = vunpack.c.h.b16 %v835
      %v902 = vunpack.c.l.b16 %v836
      %v903 = vunpack.c.l.b16 %v837
      %v904 = vunpack.c.h.b16 %v837
      %v905 = vunpack.c.l.b16 %v838
      %v906 = vunpack.c.l.b16 %v839
      %v907 = vunpack.c.h.b16 %v839
      %v908 = vunpack.c.l.b16 %v840
      %v909 = vunpack.c.l.b16 %v841
      %v910 = vunpack.c.h.b16 %v841
      %v911 = vunpack.c.l.b16 %v842
      %v912 = vunpack.c.l.b16 %v843
      %v913 = vunpack.c.h.b16 %v843
      %v914 = vunpack.c.l.b16 %v844
      %v915 = vunpack.c.l.b16 %v845
      %v916 = vunpack.c.h.b16 %v845
      %v917 = vunpack.c.l.b16 %v846
      %v918 = vunpack.c.l.b16 %v847
      %v919 = vunpack.c.h.b16 %v847
      %v920 = vunpack.c.l.b16 %v848
      %v921 = vunpack.c.l.b16 %v849
      %v922 = vunpack.c.h.b16 %v849
      %v923 = vunpack.c.l.b16 %v850
      %v924 = vunpack.c.l.b16 %v851
      %v925 = vunpack.c.h.b16 %v851
      %v926 = vunpack.c.l.b16 %v852
      %v927 = vunpack.c.l.b16 %v853
      %v928 = vunpack.c.h.b16 %v853
      %v929 = vunpack.c.l.b16 %v854
      %v930 = vunpack.c.l.b16 %v855
      %v931 = vunpack.c.h.b16 %v855
      %v932 = vunpack.c.l.b16 %v856
      %v933 = vunpack.c.l.b16 %v857
      %v934 = vunpack.c.h.b16 %v857
      %v935 = vunpack.c.l.b16 %v858
      %v936 = vunpack.c.l.b16 %v859
      %v937 = vunpack.c.h.b16 %v859
      %v938 = vunpack.c.l.b16 %v860
      %v939 = vunpack.c.l.b16 %v861
      %v940 = vunpack.c.h.b16 %v861
      %v941 = vunpack.c.l.b16 %v862
      %v942 = vunpack.c.l.b16 %v863
      %v943 = vunpack.c.h.b16 %v863
      %v944 = vunpack.c.l.b16 %v864
      %v945 = vpack.c.b16 %v900, %v897
      %v946 = vpack.c.b16 %v901, %v898
      %v947 = vpack.c.b16 %v902, %v899
      %v948 = vpack.c.b16 %v906, %v903
      %v949 = vpack.c.b16 %v907, %v904
      %v950 = vpack.c.b16 %v908, %v905
      %v951 = vpack.c.b16 %v912, %v909
      %v952 = vpack.c.b16 %v913, %v910
      %v953 = vpack.c.b16 %v914, %v911
      %v954 = vpack.c.b16 %v918, %v915
      %v955 = vpack.c.b16 %v919, %v916
      %v956 = vpack.c.b16 %v920, %v917
      %v957 = vpack.c.b16 %v924, %v921
      %v958 = vpack.c.b16 %v925, %v922
      %v959 = vpack.c.b16 %v926, %v923
      %v960 = vpack.c.b16 %v930, %v927
      %v961 = vpack.c.b16 %v931, %v928
      %v962 = vpack.c.b16 %v932, %v929
      %v963 = vpack.c.b16 %v936, %v933
      %v964 = vpack.c.b16 %v937, %v934
      %v965 = vpack.c.b16 %v938, %v935
      %v966 = vpack.c.b16 %v942, %v939
      %v967 = vpack.c.b16 %v943, %v940
      %v968 = vpack.c.b16 %v944, %v941
      %993 = vmatprep.subr.bf16.mxu0 %v946
      %994 = vmatpush1.bf16.msra.mxu0 %v945
      %995 = vmatprep.subr.bf16.mxu0 %v949
      %996 = vmatpush1.bf16.msra.mxu0 %v948
      %997 = vmatprep.subr.bf16.mxu0 %v952
      %998 = vmatpush1.bf16.msra.mxu0 %v951
      %999 = vmatprep.subr.bf16.mxu0 %v955
      %1000 = vmatpush1.bf16.msra.mxu0 %v954
      %1001 = vmatprep.subr.bf16.mxu0 %v958
      %1002 = vmatpush1.bf16.msra.mxu0 %v957
      %1003 = vmatprep.subr.bf16.mxu0 %v961
      %1004 = vmatpush1.bf16.msra.mxu0 %v960
      %1005 = vmatprep.subr.bf16.mxu0 %v964
      %1006 = vmatpush1.bf16.msra.mxu0 %v963
      %1007 = vmatprep.subr.bf16.mxu0 %v967
      %1008 = vmatpush1.bf16.msra.mxu0 %v966
      %1009 = vmatprep.subr.bf16.mxu0 0
      %1010 = vmatpush1.bf16.msra.mxu0 0
      %1011 = vmatprep.subr.bf16.mxu0 0
      %1012 = vmatpush1.bf16.msra.mxu0 0
      %1013 = vmatprep.subr.bf16.mxu0 0
      %1014 = vmatpush1.bf16.msra.mxu0 0
      %1015 = vmatprep.subr.bf16.mxu0 0
      %1016 = vmatpush1.bf16.msra.mxu0 0
      %1017 = vmatprep.subr.bf16.mxu0 0
      %1018 = vmatpush1.bf16.msra.mxu0 0
      %1019 = vmatprep.subr.bf16.mxu0 0
      %1020 = vmatpush1.bf16.msra.mxu0 0
      %1021 = vmatprep.subr.bf16.mxu0 0
      %1022 = vmatpush1.bf16.msra.mxu0 0
      %1023 = vmatprep.subr.bf16.mxu0 0
      %1024 = vmatpush1.bf16.msra.mxu0 0
      %1025 = vmatprep.mubr.bf16.mxu0 0
      %1026 = vmatmul.mubr.bf16.gmra.mrb[0].mxu0 %v831
      %v1027 = vpop.f32.mrb[0].mxu0
      %v1028 = vadd.f32 0.0, %v1027
      %v1029 = vpop.f32.mrb[0].mxu0
      %v1030 = vadd.f32 0.0, %v1029
      %v1031 = vpop.f32.mrb[0].mxu0
      %v1032 = vadd.f32 0.0, %v1031
      %v1033 = vpop.f32.mrb[0].mxu0
      %v1034 = vadd.f32 0.0, %v1033
      %1035 = vdwg.mxu0
      %1036 = vmatprep.subr.bf16.mxu0 0
      %1037 = vmatpush1.bf16.msra.mxu0 %v947
      %1038 = vmatprep.subr.bf16.mxu0 0
      %1039 = vmatpush1.bf16.msra.mxu0 %v950
      %1040 = vmatprep.subr.bf16.mxu0 0
      %1041 = vmatpush1.bf16.msra.mxu0 %v953
      %1042 = vmatprep.subr.bf16.mxu0 0
      %1043 = vmatpush1.bf16.msra.mxu0 %v956
      %1044 = vmatprep.subr.bf16.mxu0 0
      %1045 = vmatpush1.bf16.msra.mxu0 %v959
      %1046 = vmatprep.subr.bf16.mxu0 0
      %1047 = vmatpush1.bf16.msra.mxu0 %v962
      %1048 = vmatprep.subr.bf16.mxu0 0
      %1049 = vmatpush1.bf16.msra.mxu0 %v965
      %1050 = vmatprep.subr.bf16.mxu0 0
      %1051 = vmatpush1.bf16.msra.mxu0 %v968
      %1052 = vmatprep.subr.bf16.mxu0 0
      %1053 = vmatpush1.bf16.msra.mxu0 0
      %1054 = vmatprep.subr.bf16.mxu0 0
      %1055 = vmatpush1.bf16.msra.mxu0 0
      %1056 = vmatprep.subr.bf16.mxu0 0
      %1057 = vmatpush1.bf16.msra.mxu0 0
      %1058 = vmatprep.subr.bf16.mxu0 0
      %1059 = vmatpush1.bf16.msra.mxu0 0
      %1060 = vmatprep.subr.bf16.mxu0 0
      %1061 = vmatpush1.bf16.msra.mxu0 0
      %1062 = vmatprep.subr.bf16.mxu0 0
      %1063 = vmatpush1.bf16.msra.mxu0 0
      %1064 = vmatprep.subr.bf16.mxu0 0
      %1065 = vmatpush1.bf16.msra.mxu0 0
      %1066 = vmatprep.subr.bf16.mxu0 0
      %1067 = vmatpush1.bf16.msra.mxu0 0
      %1068 = vmatprep.mubr.bf16.mxu0 0
      %1069 = vmatmul.mubr.bf16.gmra.mrb[0].mxu0 %v831
      %v1070 = vpop.f32.mrb[0].mxu0
      %v1071 = vadd.f32 0.0, %v1070
      %v1072 = vpop.f32.mrb[0].mxu0
      %v1073 = vpop.f32.mrb[0].mxu0
      %v1074 = vadd.f32 0.0, %v1073
      %v1075 = vpop.f32.mrb[0].mxu0
      %1076 = vdwg.mxu0
      %v1077 = vadd.f32 %v825, %v1028
      %v1078 = vadd.f32 %v828, %v1032
      %v1079 = vxor.u32 %v1077, 2147483648
      %v1080 = vxor.u32 %v1078, 2147483648
      %v1081 = vmul.f32 %v1079, 1.442695
      %v1082 = vpow.pop %v1081
      %v1083 = vmul.f32 %v1080, 1.442695
      %v1084 = vpow.pop %v1083
      %v1085 = vadd.f32 %v1082, 1.0
      %v1086 = vadd.f32 %v1084, 1.0
      %v1087 = vrcp.pop %v1085
      %v1088 = vmul.f32 1.0, %v1087
      %v1089 = vrcp.pop %v1086
      %v1090 = vmul.f32 1.0, %v1089
      %v1091 = vadd.f32 %v826, %v1030
      %v1092 = vadd.f32 %v829, %v1034
      %v1093 = vxor.u32 %v1091, 2147483648
      %v1094 = vxor.u32 %v1092, 2147483648
      %v1095 = vmul.f32 %v1093, 1.442695
      %v1096 = vpow.pop %v1095
      %v1097 = vmul.f32 %v1094, 1.442695
      %v1098 = vpow.pop %v1097
      %v1099 = vadd.f32 %v1096, 1.0
      %v1100 = vadd.f32 %v1098, 1.0
      %v1101 = vrcp.pop %v1099
      %v1102 = vmul.f32 1.0, %v1101
      %v1103 = vrcp.pop %v1100
      %v1104 = vmul.f32 1.0, %v1103
      %v1106 = vlaneseq
      %v1107 = vshrl.u32 %v1106, 7
      %v1108 = vsub.s32 0, %v1107
      %v1109 = vrot.slane %v535, %v1108
      %v1111 = vadd.f32 %v1071, %v1109
      %v1112 = vadd.f32 %v1074, %v1109
      %v1113 = vmul.f32 %v1088, %v1111
      %v1114 = vmul.f32 %v1090, %v1112
      %v1115 = vadd.f32 %v827, %v1113
      %v1116 = vadd.f32 %v830, %v1114
      %v1117 = vtanh.pop %v1115
      %v1118 = vtanh.pop %v1116
      %v1119 = vsub.f32 %v820, %v1117
      %v1120 = vsub.f32 %v821, %v1118
      %v1121 = vmul.f32 %v1102, %v1119
      %v1122 = vmul.f32 %v1104, %v1120
      %v1123 = vadd.f32 %v1117, %v1121
      %v1124 = vadd.f32 %v1118, %v1122
    $region67: #{tpu_custom_call.1} parent=1 // loop_footer
      %s819 = sadd.s32 1, %s815
    $region68: #{tpu_custom_call.1} parent=1 // loop_footer_branch
      %814 = sbr.rel target = $region64
    $region69: #{tpu_custom_call.1} parent=1 // loop_exit
      _
    %v1125 = vpack.c.bf16 %v821, %v820
    %v1126 = vld [vmem:[%s6] sm:$0xf]
    %v1127 = vld [vmem:[%s6 + $0x4] sm:$0xf]
    %v1128 = vld [vmem:[%s6 + $0x8] sm:$0xf]
    %v1129 = vld [vmem:[%s6 + $0xc] sm:$0xf]
    %v1130 = vld [vmem:[%s6 + $0x10] sm:$0xf]
    %v1131 = vld [vmem:[%s6 + $0x14] sm:$0xf]
    %v1132 = vld [vmem:[%s6 + $0x18] sm:$0xf]
    %v1133 = vld [vmem:[%s6 + $0x1c] sm:$0xf]
    %v1134 = vld [vmem:[%s6 + $0x20] sm:$0xf]
    %v1135 = vld [vmem:[%s6 + $0x24] sm:$0xf]
    %v1136 = vld [vmem:[%s6 + $0x28] sm:$0xf]
    %v1137 = vld [vmem:[%s6 + $0x2c] sm:$0xf]
    %v1138 = vld [vmem:[%s6 + $0x30] sm:$0xf]
    %v1139 = vld [vmem:[%s6 + $0x34] sm:$0xf]
    %v1140 = vld [vmem:[%s6 + $0x38] sm:$0xf]
    %v1141 = vld [vmem:[%s6 + $0x3c] sm:$0xf]
    %v1142 = vld [vmem:[%s7] sm:$0x1]
    %v1144 = vlaneseq
    %v1145 = vshrl.u32 %v1144, 7
    %v1146 = vsub.s32 0, %v1145
    %v1147 = vrot.slane %v1142, %v1146
    %v1165 = vunpack.c.l.b16 %v1126
    %v1166 = vunpack.c.l.b16 %v1127
    %v1167 = vunpack.c.l.b16 %v1128
    %v1168 = vunpack.c.l.b16 %v1129
    %v1169 = vunpack.c.l.b16 %v1130
    %v1170 = vunpack.c.l.b16 %v1131
    %v1171 = vunpack.c.l.b16 %v1132
    %v1172 = vunpack.c.l.b16 %v1133
    %v1173 = vunpack.c.l.b16 %v1134
    %v1174 = vunpack.c.l.b16 %v1135
    %v1175 = vunpack.c.l.b16 %v1136
    %v1176 = vunpack.c.l.b16 %v1137
    %v1177 = vunpack.c.l.b16 %v1138
    %v1178 = vunpack.c.l.b16 %v1139
    %v1179 = vunpack.c.l.b16 %v1140
    %v1180 = vunpack.c.l.b16 %v1141
    %v1181 = vpack.c.b16 %v1166, %v1165
    %v1182 = vpack.c.b16 %v1168, %v1167
    %v1183 = vpack.c.b16 %v1170, %v1169
    %v1184 = vpack.c.b16 %v1172, %v1171
    %v1185 = vpack.c.b16 %v1174, %v1173
    %v1186 = vpack.c.b16 %v1176, %v1175
    %v1187 = vpack.c.b16 %v1178, %v1177
    %v1188 = vpack.c.b16 %v1180, %v1179
    %1197 = vmatprep.subr.bf16.mxu0 0
    %1198 = vmatpush1.bf16.msra.mxu0 %v1181
    %1199 = vmatprep.subr.bf16.mxu0 0
    %1200 = vmatpush1.bf16.msra.mxu0 %v1182
    %1201 = vmatprep.subr.bf16.mxu0 0
    %1202 = vmatpush1.bf16.msra.mxu0 %v1183
    %1203 = vmatprep.subr.bf16.mxu0 0
    %1204 = vmatpush1.bf16.msra.mxu0 %v1184
    %1205 = vmatprep.subr.bf16.mxu0 0
    %1206 = vmatpush1.bf16.msra.mxu0 %v1185
    %1207 = vmatprep.subr.bf16.mxu0 0
    %1208 = vmatpush1.bf16.msra.mxu0 %v1186
    %1209 = vmatprep.subr.bf16.mxu0 0
    %1210 = vmatpush1.bf16.msra.mxu0 %v1187
    %1211 = vmatprep.subr.bf16.mxu0 0
    %1212 = vmatpush1.bf16.msra.mxu0 %v1188
    %1213 = vmatprep.subr.bf16.mxu0 0
    %1214 = vmatpush1.bf16.msra.mxu0 0
    %1215 = vmatprep.subr.bf16.mxu0 0
    %1216 = vmatpush1.bf16.msra.mxu0 0
    %1217 = vmatprep.subr.bf16.mxu0 0
    %1218 = vmatpush1.bf16.msra.mxu0 0
    %1219 = vmatprep.subr.bf16.mxu0 0
    %1220 = vmatpush1.bf16.msra.mxu0 0
    %1221 = vmatprep.subr.bf16.mxu0 0
    %1222 = vmatpush1.bf16.msra.mxu0 0
    %1223 = vmatprep.subr.bf16.mxu0 0
    %1224 = vmatpush1.bf16.msra.mxu0 0
    %1225 = vmatprep.subr.bf16.mxu0 0
    %1226 = vmatpush1.bf16.msra.mxu0 0
    %1227 = vmatprep.subr.bf16.mxu0 0
    %1228 = vmatpush1.bf16.msra.mxu0 0
    %1229 = vmatprep.mubr.bf16.mxu0 0
    %1230 = vmatmul.mubr.bf16.gmra.mrb[0].mxu0 %v1125
    %v1231 = vpop.f32.mrb[0].mxu0
    %v1232 = vadd.f32 %v1147, %v1231
    %v1233 = vpop.f32.mrb[0].mxu0
    %v1234 = vpop.f32.mrb[0].mxu0
    %v1235 = vadd.f32 %v1147, %v1234
    %v1236 = vpop.f32.mrb[0].mxu0
    %1237 = vdwg.mxu0
    %1238 = vst [vmem:[#allocation9] sm:$0xff] %v1232
    %1239 = vst [vmem:[#allocation9 + $0x8] sm:$0xff] %v1235
    // Predicated region
    $region70: #{tpu_custom_call.1} parent=1 // pred_check
      _
    $region71: #{tpu_custom_call.1} parent=1 // pred_check_branch
      %1241 = sbr.rel (0) target = $region73
    $region72: #{tpu_custom_call.1} parent=1 // pred_region
      %s1243 = ssub.s32 256, 256
      %1244 = vsyncadd [#allocation6], %s1243
      %s1245 = sshll.u32 [#allocation9], 4
      %s1246 = int_to_ptr.vmem [resolvable:$true] %s1245
      %1251 = dma.vmem_to_hbm [thread:$0]  %s1246, 256, %s8, [#allocation6], 128, 128, 8
    $region73: #{tpu_custom_call.1} parent=1 // pred_fallthru
      _
    // Predicated region
    $region74: #{tpu_custom_call.1} parent=1 // pred_check
      _
    $region75: #{tpu_custom_call.1} parent=1 // pred_check_branch
      %1253 = sbr.rel (0) target = $region77
    $region76: #{tpu_custom_call.1} parent=1 // pred_region
      %1254 = dma.done [#allocation6], 256
    $region77: #{tpu_custom_call.1} parent=1 // pred_fallthru
      _
    %1255 = vsyncpa [#allocation5], 1
    %1256 = vsyncpa [#allocation8], 1
    %1257 = vsyncpa [#allocation6], 1

</llo_original>
